<compile_context>
chip_gen: v6e
topology: v6e:2x2x1
jax: 0.10.0
libtpu: 0.0.40
codegen_flags: <defaults>
</compile_context>

<pallas_src>
import numpy as np
import jax
import jax.numpy as jnp
from jax.experimental import pallas as pl
from jax.experimental.pallas import tpu as pltpu


def _round_up(n, m):
    return ((n + m - 1) // m) * m


def merge_model_kernel(x_ref, wih_ref, whh_ref, b_ref, wl_ref, bl_ref, out_ref):
    """Single-invocation kernel (no grid); whole (tiny) problem resident in VMEM.

    x_ref  : (T, D)       last batch element, time-major
    wih_ref: (D, 4*HP)    transposed W_ih, each gate block padded to HP=128k lanes
    whh_ref: (HP, 4*HP)   transposed W_hh, rows and gate blocks zero-padded
    b_ref  : (1, 4*HP)    bias_ih + bias_hh, gate blocks zero-padded
    wl_ref : (HP, OP)     transposed linear weight, zero-padded
    bl_ref : (1, OP)      linear bias, zero-padded
    out_ref: (T, OP)      lane-dense padded output (wrapper slices to (T, O))
    """
    T = x_ref.shape[0]
    HP = whh_ref.shape[0]

    # Hoisted input projection + bias: one dense MXU matmul for all time steps.
    gates_x = (jnp.dot(x_ref[...], wih_ref[...], preferred_element_type=jnp.float32)
               + b_ref[...])                                   # (T, 4*HP)

    # Hoisted weight read (single vld outside the recurrence).
    whh = whh_ref[...]                                         # (HP, 4*HP)

    h = jnp.zeros((1, HP), jnp.float32)
    c = jnp.zeros((1, HP), jnp.float32)
    hs = []
    # Static unroll: T is a small trace-time constant, so all slices/stores are static
    # and the scheduler can interleave step t+1's matmul with step t's EUP activations.
    for t in range(T):
        gates = gates_x[t:t + 1, :] + jnp.dot(h, whh,
                                              preferred_element_type=jnp.float32)
        # HP is a multiple of 128 -> every gate slice is a full-vreg (lane-aligned) slice.
        i_g = jax.nn.sigmoid(gates[:, 0 * HP:1 * HP])
        f_g = jax.nn.sigmoid(gates[:, 1 * HP:2 * HP])
        g_g = jnp.tanh(gates[:, 2 * HP:3 * HP])
        o_g = jax.nn.sigmoid(gates[:, 3 * HP:4 * HP])
        # Pad lanes: preact==0 -> g=0, c stays 0, h stays 0, so padding never leaks.
        c = f_g * c + i_g * g_g
        h = o_g * jnp.tanh(c)
        hs.append(h)

    hs_all = jnp.concatenate(hs, axis=0)                       # (T, HP), built in-register
    # Final linear layer: one MXU matmul, single lane-dense store.
    out_ref[...] = (jnp.dot(hs_all, wl_ref[...], preferred_element_type=jnp.float32)
                    + bl_ref[...]).astype(out_ref.dtype)


def _pad_gate_cols(w_t, H, HP):
    """(rows, 4H) gate-ordered columns -> (rows, 4*HP), each gate block left-aligned."""
    rows = w_t.shape[0]
    out = jnp.zeros((rows, 4 * HP), jnp.float32)
    for k in range(4):
        out = out.at[:, k * HP:k * HP + H].set(w_t[:, k * H:(k + 1) * H])
    return out


def merge_model_forward(x, params):
    """x: (B, T, D) batch_first, like the PyTorch module. Returns (T, output_size)."""
    w_ih, w_hh, b_ih, b_hh, w_lin, b_lin = params
    B, T, D = x.shape
    H = w_hh.shape[1]            # PyTorch weight_hh is (4H, H)
    O = w_lin.shape[0]
    HP = _round_up(H, 128)
    OP = _round_up(O, 128)

    # Only lstm_out[-1] (the LAST batch element) is consumed downstream, and LSTM
    # batch rows are independent with zero initial state -> run the recurrence on
    # that single row only.
    x_last = x[B - 1].astype(jnp.float32)                                   # (T, D)

    wih_p = _pad_gate_cols(jnp.transpose(w_ih).astype(jnp.float32), H, HP)  # (D, 4HP)
    whh_t = _pad_gate_cols(jnp.transpose(w_hh).astype(jnp.float32), H, HP)  # (H, 4HP)
    whh_p = jnp.zeros((HP, 4 * HP), jnp.float32).at[:H, :].set(whh_t)       # (HP, 4HP)
    b_p = _pad_gate_cols((b_ih + b_hh).astype(jnp.float32).reshape(1, 4 * H), H, HP)
    wl_p = jnp.zeros((HP, OP), jnp.float32).at[:H, :O].set(
        jnp.transpose(w_lin).astype(jnp.float32))                           # (HP, OP)
    bl_p = jnp.zeros((1, OP), jnp.float32).at[:, :O].set(
        b_lin.astype(jnp.float32).reshape(1, O))

    vmem = pl.BlockSpec(memory_space=pltpu.MemorySpace.VMEM)
    out_p = pl.pallas_call(
        merge_model_kernel,
        out_shape=jax.ShapeDtypeStruct((T, OP), jnp.float32),
        in_specs=[vmem] * 6,
        out_specs=vmem,
    )(x_last, wih_p, whh_p, b_p, wl_p, bl_p)
    return out_p[:, :O]


def merge_model_reference(x, params):
    """Pure-JAX reference mirroring torch.nn.LSTM + Linear semantics."""
    w_ih, w_hh, b_ih, b_hh, w_lin, b_lin = params
    B, T, D = x.shape
    H = w_hh.shape[1]
    h = jnp.zeros((B, H), jnp.float32)
    c = jnp.zeros((B, H), jnp.float32)
    outs = []
    for t in range(T):
        gates = x[:, t] @ w_ih.T + h @ w_hh.T + b_ih + b_hh
        i, f, g, o = jnp.split(gates, 4, axis=1)
        i = jax.nn.sigmoid(i)
        f = jax.nn.sigmoid(f)
        g = jnp.tanh(g)
        o = jax.nn.sigmoid(o)
        c = f * c + i * g
        h = o * jnp.tanh(c)
        outs.append(h)
    lstm_out = jnp.stack(outs, axis=1)        # (B, T, H)
    last = lstm_out[-1]                        # (T, H) -- last BATCH element, as in the module
    return last @ w_lin.T + b_lin


def init_params(key, input_size, hidden_size, output_size):
    D, H, O = input_size, hidden_size, output_size
    ks = jax.random.split(key, 6)
    s = 1.0 / np.sqrt(H)
    w_ih = jax.random.uniform(ks[0], (4 * H, D), jnp.float32, -s, s)
    w_hh = jax.random.uniform(ks[1], (4 * H, H), jnp.float32, -s, s)
    b_ih = jax.random.uniform(ks[2], (4 * H,), jnp.float32, -s, s)
    b_hh = jax.random.uniform(ks[3], (4 * H,), jnp.float32, -s, s)
    w_lin = jax.random.uniform(ks[4], (O, H), jnp.float32, -s, s)
    b_lin = jax.random.uniform(ks[5], (O,), jnp.float32, -s, s)
    return (w_ih, w_hh, b_ih, b_hh, w_lin, b_lin)


if __name__ == "__main__":
    B, T, D, H, O = 2, 8, 16, 32, 8
    key = jax.random.PRNGKey(0)
    k_x, k_p = jax.random.split(key)
    x = jax.random.normal(k_x, (B, T, D), jnp.float32)
    params = init_params(k_p, D, H, O)

    out = merge_model_forward(x, params)
    out = jax.block_until_ready(out)

    ref = merge_model_reference(x, params)
    np.testing.assert_allclose(np.asarray(out), np.asarray(ref), rtol=1e-4, atol=1e-5)
    assert out.shape == (T, O)
    print("KERNEL_OK")
</pallas_src>

<mosaic_0001>
module attributes {stable_mosaic.version = 11 : i64} {
  func.func @merge_model_kernel(%arg0: memref<8x16xf32, #tpu.memory_space<vmem>>, %arg1: memref<16x512xf32, #tpu.memory_space<vmem>>, %arg2: memref<128x512xf32, #tpu.memory_space<vmem>>, %arg3: memref<1x512xf32, #tpu.memory_space<vmem>>, %arg4: memref<128x128xf32, #tpu.memory_space<vmem>>, %arg5: memref<1x128xf32, #tpu.memory_space<vmem>>, %arg6: memref<8x128xf32, #tpu.memory_space<vmem>>) attributes {dimension_semantics = [], scalar_prefetch = 0 : i64, scratch_operands = 0 : i64, tpu.core_type = #tpu.core_type<tc>} {
    %c0 = arith.constant 0 : index
    %c0_0 = arith.constant 0 : index
    %0 = vector.load %arg0[%c0, %c0_0] : memref<8x16xf32, #tpu.memory_space<vmem>>, vector<8x16xf32>
    %c0_1 = arith.constant 0 : index
    %c0_2 = arith.constant 0 : index
    %1 = vector.load %arg1[%c0_1, %c0_2] : memref<16x512xf32, #tpu.memory_space<vmem>>, vector<16x512xf32>
    %cst = arith.constant dense<0.000000e+00> : vector<8x512xf32>
    %2 = tpu.matmul %0, %1, %cst {dimension_numbers = #tpu.dot_dimension_numbers<[1], [0], [0], [1], [0, 0, 1, 1], [], []>} : vector<8x16xf32>, vector<16x512xf32>, vector<8x512xf32> -> vector<8x512xf32>
    %c0_3 = arith.constant 0 : index
    %c0_4 = arith.constant 0 : index
    %3 = vector.load %arg3[%c0_3, %c0_4] : memref<1x512xf32, #tpu.memory_space<vmem>>, vector<1x512xf32>
    %4 = vector.broadcast %3 : vector<1x512xf32> to vector<8x512xf32>
    %5 = arith.addf %2, %4 : vector<8x512xf32>
    %c0_5 = arith.constant 0 : index
    %c0_6 = arith.constant 0 : index
    %6 = vector.load %arg2[%c0_5, %c0_6] : memref<128x512xf32, #tpu.memory_space<vmem>>, vector<128x512xf32>
    %cst_7 = arith.constant 0.000000e+00 : f32
    %7 = vector.broadcast %cst_7 : f32 to vector<1x128xf32>
    %cst_8 = arith.constant 0.000000e+00 : f32
    %8 = vector.broadcast %cst_8 : f32 to vector<1x128xf32>
    %9 = vector.extract_strided_slice %5 {offsets = [0, 0], sizes = [1, 512], strides = [1, 1]} : vector<8x512xf32> to vector<1x512xf32>
    %cst_9 = arith.constant dense<0.000000e+00> : vector<1x512xf32>
    %10 = tpu.matmul %7, %6, %cst_9 {dimension_numbers = #tpu.dot_dimension_numbers<[1], [0], [0], [1], [0, 0, 1, 1], [], []>} : vector<1x128xf32>, vector<128x512xf32>, vector<1x512xf32> -> vector<1x512xf32>
    %11 = arith.addf %9, %10 : vector<1x512xf32>
    %12 = vector.extract_strided_slice %11 {offsets = [0, 0], sizes = [1, 128], strides = [1, 1]} : vector<1x512xf32> to vector<1x128xf32>
    %13 = arith.negf %12 : vector<1x128xf32>
    %14 = math.exp %13 : vector<1x128xf32>
    %cst_10 = arith.constant 1.000000e+00 : f32
    %15 = vector.broadcast %cst_10 : f32 to vector<1x128xf32>
    %16 = arith.addf %15, %14 : vector<1x128xf32>
    %17 = arith.divf %15, %16 : vector<1x128xf32>
    %18 = vector.extract_strided_slice %11 {offsets = [0, 128], sizes = [1, 128], strides = [1, 1]} : vector<1x512xf32> to vector<1x128xf32>
    %19 = arith.negf %18 : vector<1x128xf32>
    %20 = math.exp %19 : vector<1x128xf32>
    %cst_11 = arith.constant 1.000000e+00 : f32
    %21 = vector.broadcast %cst_11 : f32 to vector<1x128xf32>
    %22 = arith.addf %21, %20 : vector<1x128xf32>
    %23 = arith.divf %21, %22 : vector<1x128xf32>
    %24 = vector.extract_strided_slice %11 {offsets = [0, 256], sizes = [1, 128], strides = [1, 1]} : vector<1x512xf32> to vector<1x128xf32>
    %25 = math.tanh %24 : vector<1x128xf32>
    %26 = vector.extract_strided_slice %11 {offsets = [0, 384], sizes = [1, 128], strides = [1, 1]} : vector<1x512xf32> to vector<1x128xf32>
    %27 = arith.negf %26 : vector<1x128xf32>
    %28 = math.exp %27 : vector<1x128xf32>
    %cst_12 = arith.constant 1.000000e+00 : f32
    %29 = vector.broadcast %cst_12 : f32 to vector<1x128xf32>
    %30 = arith.addf %29, %28 : vector<1x128xf32>
    %31 = arith.divf %29, %30 : vector<1x128xf32>
    %32 = arith.mulf %23, %8 : vector<1x128xf32>
    %33 = arith.mulf %17, %25 : vector<1x128xf32>
    %34 = arith.addf %32, %33 : vector<1x128xf32>
    %35 = math.tanh %34 : vector<1x128xf32>
    %36 = arith.mulf %31, %35 : vector<1x128xf32>
    %37 = vector.extract_strided_slice %5 {offsets = [1, 0], sizes = [1, 512], strides = [1, 1]} : vector<8x512xf32> to vector<1x512xf32>
    %cst_13 = arith.constant dense<0.000000e+00> : vector<1x512xf32>
    %38 = tpu.matmul %36, %6, %cst_13 {dimension_numbers = #tpu.dot_dimension_numbers<[1], [0], [0], [1], [0, 0, 1, 1], [], []>} : vector<1x128xf32>, vector<128x512xf32>, vector<1x512xf32> -> vector<1x512xf32>
    %39 = arith.addf %37, %38 : vector<1x512xf32>
    %40 = vector.extract_strided_slice %39 {offsets = [0, 0], sizes = [1, 128], strides = [1, 1]} : vector<1x512xf32> to vector<1x128xf32>
    %41 = arith.negf %40 : vector<1x128xf32>
    %42 = math.exp %41 : vector<1x128xf32>
    %cst_14 = arith.constant 1.000000e+00 : f32
    %43 = vector.broadcast %cst_14 : f32 to vector<1x128xf32>
    %44 = arith.addf %43, %42 : vector<1x128xf32>
    %45 = arith.divf %43, %44 : vector<1x128xf32>
    %46 = vector.extract_strided_slice %39 {offsets = [0, 128], sizes = [1, 128], strides = [1, 1]} : vector<1x512xf32> to vector<1x128xf32>
    %47 = arith.negf %46 : vector<1x128xf32>
    %48 = math.exp %47 : vector<1x128xf32>
    %cst_15 = arith.constant 1.000000e+00 : f32
    %49 = vector.broadcast %cst_15 : f32 to vector<1x128xf32>
    %50 = arith.addf %49, %48 : vector<1x128xf32>
    %51 = arith.divf %49, %50 : vector<1x128xf32>
    %52 = vector.extract_strided_slice %39 {offsets = [0, 256], sizes = [1, 128], strides = [1, 1]} : vector<1x512xf32> to vector<1x128xf32>
    %53 = math.tanh %52 : vector<1x128xf32>
    %54 = vector.extract_strided_slice %39 {offsets = [0, 384], sizes = [1, 128], strides = [1, 1]} : vector<1x512xf32> to vector<1x128xf32>
    %55 = arith.negf %54 : vector<1x128xf32>
    %56 = math.exp %55 : vector<1x128xf32>
    %cst_16 = arith.constant 1.000000e+00 : f32
    %57 = vector.broadcast %cst_16 : f32 to vector<1x128xf32>
    %58 = arith.addf %57, %56 : vector<1x128xf32>
    %59 = arith.divf %57, %58 : vector<1x128xf32>
    %60 = arith.mulf %51, %34 : vector<1x128xf32>
    %61 = arith.mulf %45, %53 : vector<1x128xf32>
    %62 = arith.addf %60, %61 : vector<1x128xf32>
    %63 = math.tanh %62 : vector<1x128xf32>
    %64 = arith.mulf %59, %63 : vector<1x128xf32>
    %65 = vector.extract_strided_slice %5 {offsets = [2, 0], sizes = [1, 512], strides = [1, 1]} : vector<8x512xf32> to vector<1x512xf32>
    %cst_17 = arith.constant dense<0.000000e+00> : vector<1x512xf32>
    %66 = tpu.matmul %64, %6, %cst_17 {dimension_numbers = #tpu.dot_dimension_numbers<[1], [0], [0], [1], [0, 0, 1, 1], [], []>} : vector<1x128xf32>, vector<128x512xf32>, vector<1x512xf32> -> vector<1x512xf32>
    %67 = arith.addf %65, %66 : vector<1x512xf32>
    %68 = vector.extract_strided_slice %67 {offsets = [0, 0], sizes = [1, 128], strides = [1, 1]} : vector<1x512xf32> to vector<1x128xf32>
    %69 = arith.negf %68 : vector<1x128xf32>
    %70 = math.exp %69 : vector<1x128xf32>
    %cst_18 = arith.constant 1.000000e+00 : f32
    %71 = vector.broadcast %cst_18 : f32 to vector<1x128xf32>
    %72 = arith.addf %71, %70 : vector<1x128xf32>
    %73 = arith.divf %71, %72 : vector<1x128xf32>
    %74 = vector.extract_strided_slice %67 {offsets = [0, 128], sizes = [1, 128], strides = [1, 1]} : vector<1x512xf32> to vector<1x128xf32>
    %75 = arith.negf %74 : vector<1x128xf32>
    %76 = math.exp %75 : vector<1x128xf32>
    %cst_19 = arith.constant 1.000000e+00 : f32
    %77 = vector.broadcast %cst_19 : f32 to vector<1x128xf32>
    %78 = arith.addf %77, %76 : vector<1x128xf32>
    %79 = arith.divf %77, %78 : vector<1x128xf32>
    %80 = vector.extract_strided_slice %67 {offsets = [0, 256], sizes = [1, 128], strides = [1, 1]} : vector<1x512xf32> to vector<1x128xf32>
    %81 = math.tanh %80 : vector<1x128xf32>
    %82 = vector.extract_strided_slice %67 {offsets = [0, 384], sizes = [1, 128], strides = [1, 1]} : vector<1x512xf32> to vector<1x128xf32>
    %83 = arith.negf %82 : vector<1x128xf32>
    %84 = math.exp %83 : vector<1x128xf32>
    %cst_20 = arith.constant 1.000000e+00 : f32
    %85 = vector.broadcast %cst_20 : f32 to vector<1x128xf32>
    %86 = arith.addf %85, %84 : vector<1x128xf32>
    %87 = arith.divf %85, %86 : vector<1x128xf32>
    %88 = arith.mulf %79, %62 : vector<1x128xf32>
    %89 = arith.mulf %73, %81 : vector<1x128xf32>
    %90 = arith.addf %88, %89 : vector<1x128xf32>
    %91 = math.tanh %90 : vector<1x128xf32>
    %92 = arith.mulf %87, %91 : vector<1x128xf32>
    %93 = vector.extract_strided_slice %5 {offsets = [3, 0], sizes = [1, 512], strides = [1, 1]} : vector<8x512xf32> to vector<1x512xf32>
    %cst_21 = arith.constant dense<0.000000e+00> : vector<1x512xf32>
    %94 = tpu.matmul %92, %6, %cst_21 {dimension_numbers = #tpu.dot_dimension_numbers<[1], [0], [0], [1], [0, 0, 1, 1], [], []>} : vector<1x128xf32>, vector<128x512xf32>, vector<1x512xf32> -> vector<1x512xf32>
    %95 = arith.addf %93, %94 : vector<1x512xf32>
    %96 = vector.extract_strided_slice %95 {offsets = [0, 0], sizes = [1, 128], strides = [1, 1]} : vector<1x512xf32> to vector<1x128xf32>
    %97 = arith.negf %96 : vector<1x128xf32>
    %98 = math.exp %97 : vector<1x128xf32>
    %cst_22 = arith.constant 1.000000e+00 : f32
    %99 = vector.broadcast %cst_22 : f32 to vector<1x128xf32>
    %100 = arith.addf %99, %98 : vector<1x128xf32>
    %101 = arith.divf %99, %100 : vector<1x128xf32>
    %102 = vector.extract_strided_slice %95 {offsets = [0, 128], sizes = [1, 128], strides = [1, 1]} : vector<1x512xf32> to vector<1x128xf32>
    %103 = arith.negf %102 : vector<1x128xf32>
    %104 = math.exp %103 : vector<1x128xf32>
    %cst_23 = arith.constant 1.000000e+00 : f32
    %105 = vector.broadcast %cst_23 : f32 to vector<1x128xf32>
    %106 = arith.addf %105, %104 : vector<1x128xf32>
    %107 = arith.divf %105, %106 : vector<1x128xf32>
    %108 = vector.extract_strided_slice %95 {offsets = [0, 256], sizes = [1, 128], strides = [1, 1]} : vector<1x512xf32> to vector<1x128xf32>
    %109 = math.tanh %108 : vector<1x128xf32>
    %110 = vector.extract_strided_slice %95 {offsets = [0, 384], sizes = [1, 128], strides = [1, 1]} : vector<1x512xf32> to vector<1x128xf32>
    %111 = arith.negf %110 : vector<1x128xf32>
    %112 = math.exp %111 : vector<1x128xf32>
    %cst_24 = arith.constant 1.000000e+00 : f32
    %113 = vector.broadcast %cst_24 : f32 to vector<1x128xf32>
    %114 = arith.addf %113, %112 : vector<1x128xf32>
    %115 = arith.divf %113, %114 : vector<1x128xf32>
    %116 = arith.mulf %107, %90 : vector<1x128xf32>
    %117 = arith.mulf %101, %109 : vector<1x128xf32>
    %118 = arith.addf %116, %117 : vector<1x128xf32>
    %119 = math.tanh %118 : vector<1x128xf32>
    %120 = arith.mulf %115, %119 : vector<1x128xf32>
    %121 = vector.extract_strided_slice %5 {offsets = [4, 0], sizes = [1, 512], strides = [1, 1]} : vector<8x512xf32> to vector<1x512xf32>
    %cst_25 = arith.constant dense<0.000000e+00> : vector<1x512xf32>
    %122 = tpu.matmul %120, %6, %cst_25 {dimension_numbers = #tpu.dot_dimension_numbers<[1], [0], [0], [1], [0, 0, 1, 1], [], []>} : vector<1x128xf32>, vector<128x512xf32>, vector<1x512xf32> -> vector<1x512xf32>
    %123 = arith.addf %121, %122 : vector<1x512xf32>
    %124 = vector.extract_strided_slice %123 {offsets = [0, 0], sizes = [1, 128], strides = [1, 1]} : vector<1x512xf32> to vector<1x128xf32>
    %125 = arith.negf %124 : vector<1x128xf32>
    %126 = math.exp %125 : vector<1x128xf32>
    %cst_26 = arith.constant 1.000000e+00 : f32
    %127 = vector.broadcast %cst_26 : f32 to vector<1x128xf32>
    %128 = arith.addf %127, %126 : vector<1x128xf32>
    %129 = arith.divf %127, %128 : vector<1x128xf32>
    %130 = vector.extract_strided_slice %123 {offsets = [0, 128], sizes = [1, 128], strides = [1, 1]} : vector<1x512xf32> to vector<1x128xf32>
    %131 = arith.negf %130 : vector<1x128xf32>
    %132 = math.exp %131 : vector<1x128xf32>
    %cst_27 = arith.constant 1.000000e+00 : f32
    %133 = vector.broadcast %cst_27 : f32 to vector<1x128xf32>
    %134 = arith.addf %133, %132 : vector<1x128xf32>
    %135 = arith.divf %133, %134 : vector<1x128xf32>
    %136 = vector.extract_strided_slice %123 {offsets = [0, 256], sizes = [1, 128], strides = [1, 1]} : vector<1x512xf32> to vector<1x128xf32>
    %137 = math.tanh %136 : vector<1x128xf32>
    %138 = vector.extract_strided_slice %123 {offsets = [0, 384], sizes = [1, 128], strides = [1, 1]} : vector<1x512xf32> to vector<1x128xf32>
    %139 = arith.negf %138 : vector<1x128xf32>
    %140 = math.exp %139 : vector<1x128xf32>
    %cst_28 = arith.constant 1.000000e+00 : f32
    %141 = vector.broadcast %cst_28 : f32 to vector<1x128xf32>
    %142 = arith.addf %141, %140 : vector<1x128xf32>
    %143 = arith.divf %141, %142 : vector<1x128xf32>
    %144 = arith.mulf %135, %118 : vector<1x128xf32>
    %145 = arith.mulf %129, %137 : vector<1x128xf32>
    %146 = arith.addf %144, %145 : vector<1x128xf32>
    %147 = math.tanh %146 : vector<1x128xf32>
    %148 = arith.mulf %143, %147 : vector<1x128xf32>
    %149 = vector.extract_strided_slice %5 {offsets = [5, 0], sizes = [1, 512], strides = [1, 1]} : vector<8x512xf32> to vector<1x512xf32>
    %cst_29 = arith.constant dense<0.000000e+00> : vector<1x512xf32>
    %150 = tpu.matmul %148, %6, %cst_29 {dimension_numbers = #tpu.dot_dimension_numbers<[1], [0], [0], [1], [0, 0, 1, 1], [], []>} : vector<1x128xf32>, vector<128x512xf32>, vector<1x512xf32> -> vector<1x512xf32>
    %151 = arith.addf %149, %150 : vector<1x512xf32>
    %152 = vector.extract_strided_slice %151 {offsets = [0, 0], sizes = [1, 128], strides = [1, 1]} : vector<1x512xf32> to vector<1x128xf32>
    %153 = arith.negf %152 : vector<1x128xf32>
    %154 = math.exp %153 : vector<1x128xf32>
    %cst_30 = arith.constant 1.000000e+00 : f32
    %155 = vector.broadcast %cst_30 : f32 to vector<1x128xf32>
    %156 = arith.addf %155, %154 : vector<1x128xf32>
    %157 = arith.divf %155, %156 : vector<1x128xf32>
    %158 = vector.extract_strided_slice %151 {offsets = [0, 128], sizes = [1, 128], strides = [1, 1]} : vector<1x512xf32> to vector<1x128xf32>
    %159 = arith.negf %158 : vector<1x128xf32>
    %160 = math.exp %159 : vector<1x128xf32>
    %cst_31 = arith.constant 1.000000e+00 : f32
    %161 = vector.broadcast %cst_31 : f32 to vector<1x128xf32>
    %162 = arith.addf %161, %160 : vector<1x128xf32>
    %163 = arith.divf %161, %162 : vector<1x128xf32>
    %164 = vector.extract_strided_slice %151 {offsets = [0, 256], sizes = [1, 128], strides = [1, 1]} : vector<1x512xf32> to vector<1x128xf32>
    %165 = math.tanh %164 : vector<1x128xf32>
    %166 = vector.extract_strided_slice %151 {offsets = [0, 384], sizes = [1, 128], strides = [1, 1]} : vector<1x512xf32> to vector<1x128xf32>
    %167 = arith.negf %166 : vector<1x128xf32>
    %168 = math.exp %167 : vector<1x128xf32>
    %cst_32 = arith.constant 1.000000e+00 : f32
    %169 = vector.broadcast %cst_32 : f32 to vector<1x128xf32>
    %170 = arith.addf %169, %168 : vector<1x128xf32>
    %171 = arith.divf %169, %170 : vector<1x128xf32>
    %172 = arith.mulf %163, %146 : vector<1x128xf32>
    %173 = arith.mulf %157, %165 : vector<1x128xf32>
    %174 = arith.addf %172, %173 : vector<1x128xf32>
    %175 = math.tanh %174 : vector<1x128xf32>
    %176 = arith.mulf %171, %175 : vector<1x128xf32>
    %177 = vector.extract_strided_slice %5 {offsets = [6, 0], sizes = [1, 512], strides = [1, 1]} : vector<8x512xf32> to vector<1x512xf32>
    %cst_33 = arith.constant dense<0.000000e+00> : vector<1x512xf32>
    %178 = tpu.matmul %176, %6, %cst_33 {dimension_numbers = #tpu.dot_dimension_numbers<[1], [0], [0], [1], [0, 0, 1, 1], [], []>} : vector<1x128xf32>, vector<128x512xf32>, vector<1x512xf32> -> vector<1x512xf32>
    %179 = arith.addf %177, %178 : vector<1x512xf32>
    %180 = vector.extract_strided_slice %179 {offsets = [0, 0], sizes = [1, 128], strides = [1, 1]} : vector<1x512xf32> to vector<1x128xf32>
    %181 = arith.negf %180 : vector<1x128xf32>
    %182 = math.exp %181 : vector<1x128xf32>
    %cst_34 = arith.constant 1.000000e+00 : f32
    %183 = vector.broadcast %cst_34 : f32 to vector<1x128xf32>
    %184 = arith.addf %183, %182 : vector<1x128xf32>
    %185 = arith.divf %183, %184 : vector<1x128xf32>
    %186 = vector.extract_strided_slice %179 {offsets = [0, 128], sizes = [1, 128], strides = [1, 1]} : vector<1x512xf32> to vector<1x128xf32>
    %187 = arith.negf %186 : vector<1x128xf32>
    %188 = math.exp %187 : vector<1x128xf32>
    %cst_35 = arith.constant 1.000000e+00 : f32
    %189 = vector.broadcast %cst_35 : f32 to vector<1x128xf32>
    %190 = arith.addf %189, %188 : vector<1x128xf32>
    %191 = arith.divf %189, %190 : vector<1x128xf32>
    %192 = vector.extract_strided_slice %179 {offsets = [0, 256], sizes = [1, 128], strides = [1, 1]} : vector<1x512xf32> to vector<1x128xf32>
    %193 = math.tanh %192 : vector<1x128xf32>
    %194 = vector.extract_strided_slice %179 {offsets = [0, 384], sizes = [1, 128], strides = [1, 1]} : vector<1x512xf32> to vector<1x128xf32>
    %195 = arith.negf %194 : vector<1x128xf32>
    %196 = math.exp %195 : vector<1x128xf32>
    %cst_36 = arith.constant 1.000000e+00 : f32
    %197 = vector.broadcast %cst_36 : f32 to vector<1x128xf32>
    %198 = arith.addf %197, %196 : vector<1x128xf32>
    %199 = arith.divf %197, %198 : vector<1x128xf32>
    %200 = arith.mulf %191, %174 : vector<1x128xf32>
    %201 = arith.mulf %185, %193 : vector<1x128xf32>
    %202 = arith.addf %200, %201 : vector<1x128xf32>
    %203 = math.tanh %202 : vector<1x128xf32>
    %204 = arith.mulf %199, %203 : vector<1x128xf32>
    %205 = vector.extract_strided_slice %5 {offsets = [7, 0], sizes = [1, 512], strides = [1, 1]} : vector<8x512xf32> to vector<1x512xf32>
    %cst_37 = arith.constant dense<0.000000e+00> : vector<1x512xf32>
    %206 = tpu.matmul %204, %6, %cst_37 {dimension_numbers = #tpu.dot_dimension_numbers<[1], [0], [0], [1], [0, 0, 1, 1], [], []>} : vector<1x128xf32>, vector<128x512xf32>, vector<1x512xf32> -> vector<1x512xf32>
    %207 = arith.addf %205, %206 : vector<1x512xf32>
    %208 = vector.extract_strided_slice %207 {offsets = [0, 0], sizes = [1, 128], strides = [1, 1]} : vector<1x512xf32> to vector<1x128xf32>
    %209 = arith.negf %208 : vector<1x128xf32>
    %210 = math.exp %209 : vector<1x128xf32>
    %cst_38 = arith.constant 1.000000e+00 : f32
    %211 = vector.broadcast %cst_38 : f32 to vector<1x128xf32>
    %212 = arith.addf %211, %210 : vector<1x128xf32>
    %213 = arith.divf %211, %212 : vector<1x128xf32>
    %214 = vector.extract_strided_slice %207 {offsets = [0, 128], sizes = [1, 128], strides = [1, 1]} : vector<1x512xf32> to vector<1x128xf32>
    %215 = arith.negf %214 : vector<1x128xf32>
    %216 = math.exp %215 : vector<1x128xf32>
    %cst_39 = arith.constant 1.000000e+00 : f32
    %217 = vector.broadcast %cst_39 : f32 to vector<1x128xf32>
    %218 = arith.addf %217, %216 : vector<1x128xf32>
    %219 = arith.divf %217, %218 : vector<1x128xf32>
    %220 = vector.extract_strided_slice %207 {offsets = [0, 256], sizes = [1, 128], strides = [1, 1]} : vector<1x512xf32> to vector<1x128xf32>
    %221 = math.tanh %220 : vector<1x128xf32>
    %222 = vector.extract_strided_slice %207 {offsets = [0, 384], sizes = [1, 128], strides = [1, 1]} : vector<1x512xf32> to vector<1x128xf32>
    %223 = arith.negf %222 : vector<1x128xf32>
    %224 = math.exp %223 : vector<1x128xf32>
    %cst_40 = arith.constant 1.000000e+00 : f32
    %225 = vector.broadcast %cst_40 : f32 to vector<1x128xf32>
    %226 = arith.addf %225, %224 : vector<1x128xf32>
    %227 = arith.divf %225, %226 : vector<1x128xf32>
    %228 = arith.mulf %219, %202 : vector<1x128xf32>
    %229 = arith.mulf %213, %221 : vector<1x128xf32>
    %230 = arith.addf %228, %229 : vector<1x128xf32>
    %231 = math.tanh %230 : vector<1x128xf32>
    %232 = arith.mulf %227, %231 : vector<1x128xf32>
    %233 = tpu.concatenate %36, %64, %92, %120, %148, %176, %204, %232 in 0 : vector<1x128xf32>, vector<1x128xf32>, vector<1x128xf32>, vector<1x128xf32>, vector<1x128xf32>, vector<1x128xf32>, vector<1x128xf32>, vector<1x128xf32> -> vector<8x128xf32>
    %c0_41 = arith.constant 0 : index
    %c0_42 = arith.constant 0 : index
    %234 = vector.load %arg4[%c0_41, %c0_42] : memref<128x128xf32, #tpu.memory_space<vmem>>, vector<128x128xf32>
    %cst_43 = arith.constant dense<0.000000e+00> : vector<8x128xf32>
    %235 = tpu.matmul %233, %234, %cst_43 {dimension_numbers = #tpu.dot_dimension_numbers<[1], [0], [0], [1], [0, 0, 1, 1], [], []>} : vector<8x128xf32>, vector<128x128xf32>, vector<8x128xf32> -> vector<8x128xf32>
    %c0_44 = arith.constant 0 : index
    %c0_45 = arith.constant 0 : index
    %236 = vector.load %arg5[%c0_44, %c0_45] : memref<1x128xf32, #tpu.memory_space<vmem>>, vector<1x128xf32>
    %237 = vector.broadcast %236 : vector<1x128xf32> to vector<8x128xf32>
    %238 = arith.addf %235, %237 : vector<8x128xf32>
    %c0_46 = arith.constant 0 : index
    %c0_47 = arith.constant 0 : index
    %239 = vector.load %arg6[%c0_46, %c0_47] : memref<8x128xf32, #tpu.memory_space<vmem>>, vector<8x128xf32>
    tpu.vector_store %arg6[%c0_46, %c0_47], %238 {strides = array<i32>} : memref<8x128xf32, #tpu.memory_space<vmem>>, vector<8x128xf32>,
    return
  }
}

</mosaic_0001>

<llo_original>
// kernel: tpu_custom_call.1
$region0: #{tpu_custom_call.1}
  #allocation0 [shape = 'u32[]', space=smem, size = 0x4, offset = 0x4, fixed_abs, tag = 'smem constant byte address 0x4 - core index']
  #allocation1 [shape = 'u32[144,128]{1,0:T(1,128)}', space=vmem, size = 0x12000, scoped, tag = 'internal scratch']
  %s0 = inlined_call_operand.hbm [shape: f32[8,16], index: 0, kind: input, shape index: {}]
  %s1 = inlined_call_operand.hbm [shape: f32[16,512], index: 1, kind: input, shape index: {}]
  %s2 = inlined_call_operand.hbm [shape: f32[128,512], index: 2, kind: input, shape index: {}]
  %s3 = inlined_call_operand.vmem [shape: f32[1,512], index: 3, kind: input, shape index: {}]
  %s4 = inlined_call_operand.hbm [shape: f32[128,128], index: 4, kind: input, shape index: {}]
  %s5 = inlined_call_operand.vmem [shape: f32[1,128], index: 5, kind: input, shape index: {}]
  %s6 = inlined_call_operand.hbm [shape: f32[8,128], index: 6, kind: output, shape index: {}]
  %s7 = sld [smem:[#allocation0]]
  $region50: #{tpu_custom_call.1} parent=0
    _
  %s9 = ssub.s32 1, %s7
  %s10 = scalar_select 0, %s9, %s7
  $region1: #{tpu_custom_call.1} parent=0
    #allocation2 [shape = 'u8[4096]{0}', space=vmem, size = 0x1000, scoped, tag = 'input window, operand 0, single buffered']
    #allocation3 [shape = 's32[1]{0}', space=sflag, size = 0x4, scoped, tag = 'scoped memory for tpu_custom_call.1']
    #allocation4 [shape = 's32[1]{0}', space=sflag, size = 0x4, scoped, tag = 'scoped memory for tpu_custom_call.1']
    #allocation5 [shape = 'u8[32768]{0}', space=vmem, size = 0x8000, scoped, tag = 'input window, operand 1, single buffered']
    #allocation6 [shape = 's32[1]{0}', space=sflag, size = 0x4, scoped, tag = 'scoped memory for tpu_custom_call.1']
    #allocation7 [shape = 'u8[262144]{0}', space=vmem, size = 0x40000, scoped, tag = 'input window, operand 2, single buffered']
    #allocation8 [shape = 'u8[65536]{0}', space=vmem, size = 0x10000, scoped, tag = 'input window, operand 4, single buffered']
    #allocation9 [shape = 's32[1]{0}', space=sflag, size = 0x4, scoped, tag = 'scoped memory for tpu_custom_call.1']
    #allocation10 [shape = 'u8[4096]{0}', space=vmem, size = 0x1000, scoped, tag = 'output window, operand 0, single buffered']
    %11 = vsyncpa [#allocation3], 0
    %12 = vsyncpa [#allocation6], 0
    %13 = vsyncpa [#allocation9], 0
    %14 = vsyncpa [#allocation4], 0
    // Predicated region
    $region2: #{tpu_custom_call.1} parent=1 // pred_check
      _
    $region3: #{tpu_custom_call.1} parent=1 // pred_check_branch
      %16 = sbr.rel (0) target = $region5
    $region4: #{tpu_custom_call.1} parent=1 // pred_region
      %s18 = ssub.s32 128, 128
      %19 = vsyncadd [#allocation3], %s18
      %s21 = sshll.u32 [#allocation2], 4
      %s22 = int_to_ptr.vmem [resolvable:$true] %s21
      %24 = dma.hbm_to_vmem [thread:$0]  %s0, 128, %s22, [#allocation3]
    $region5: #{tpu_custom_call.1} parent=1 // pred_fallthru
      _
    // Predicated region
    $region6: #{tpu_custom_call.1} parent=1 // pred_check
      _
    $region7: #{tpu_custom_call.1} parent=1 // pred_check_branch
      %26 = sbr.rel (0) target = $region9
    $region8: #{tpu_custom_call.1} parent=1 // pred_region
      %s28 = ssub.s32 1024, 1024
      %29 = vsyncadd [#allocation6], %s28
      %s30 = sshll.u32 [#allocation5], 4
      %s31 = int_to_ptr.vmem [resolvable:$true] %s30
      %36 = dma.hbm_to_vmem [thread:$0]  %s1, 1024, %s31, [#allocation6], 512, 512, 32
    $region9: #{tpu_custom_call.1} parent=1 // pred_fallthru
      _
    // Predicated region
    $region10: #{tpu_custom_call.1} parent=1 // pred_check
      _
    $region11: #{tpu_custom_call.1} parent=1 // pred_check_branch
      %38 = sbr.rel (0) target = $region13
    $region12: #{tpu_custom_call.1} parent=1 // pred_region
      %s40 = ssub.s32 8192, 8192
      %41 = vsyncadd [#allocation6], %s40
      %s42 = sshll.u32 [#allocation7], 4
      %s43 = int_to_ptr.vmem [resolvable:$true] %s42
      %48 = dma.hbm_to_vmem [thread:$0]  %s2, 8192, %s43, [#allocation6], 512, 512, 32
    $region13: #{tpu_custom_call.1} parent=1 // pred_fallthru
      _
    // Predicated region
    $region14: #{tpu_custom_call.1} parent=1 // pred_check
      _
    $region15: #{tpu_custom_call.1} parent=1 // pred_check_branch
      %50 = sbr.rel (0) target = $region17
    $region16: #{tpu_custom_call.1} parent=1 // pred_region
      _
    $region17: #{tpu_custom_call.1} parent=1 // pred_fallthru
      _
    // Predicated region
    $region18: #{tpu_custom_call.1} parent=1 // pred_check
      _
    $region19: #{tpu_custom_call.1} parent=1 // pred_check_branch
      %52 = sbr.rel (0) target = $region21
    $region20: #{tpu_custom_call.1} parent=1 // pred_region
      %s54 = ssub.s32 2048, 2048
      %55 = vsyncadd [#allocation9], %s54
      %s56 = sshll.u32 [#allocation8], 4
      %s57 = int_to_ptr.vmem [resolvable:$true] %s56
      %62 = dma.hbm_to_vmem [thread:$0]  %s4, 2048, %s57, [#allocation9], 128, 128, 8
    $region21: #{tpu_custom_call.1} parent=1 // pred_fallthru
      _
    // Predicated region
    $region22: #{tpu_custom_call.1} parent=1 // pred_check
      _
    $region23: #{tpu_custom_call.1} parent=1 // pred_check_branch
      %64 = sbr.rel (0) target = $region25
    $region24: #{tpu_custom_call.1} parent=1 // pred_region
      _
    $region25: #{tpu_custom_call.1} parent=1 // pred_fallthru
      _
    // Predicated region
    $region26: #{tpu_custom_call.1} parent=1 // pred_check
      _
    $region27: #{tpu_custom_call.1} parent=1 // pred_check_branch
      %66 = sbr.rel (0) target = $region29
    $region28: #{tpu_custom_call.1} parent=1 // pred_region
      %67 = dma.done [#allocation3], 128
    $region29: #{tpu_custom_call.1} parent=1 // pred_fallthru
      _
    // Predicated region
    $region30: #{tpu_custom_call.1} parent=1 // pred_check
      _
    $region31: #{tpu_custom_call.1} parent=1 // pred_check_branch
      %69 = sbr.rel (0) target = $region33
    $region32: #{tpu_custom_call.1} parent=1 // pred_region
      %70 = dma.done [#allocation6], 1024
    $region33: #{tpu_custom_call.1} parent=1 // pred_fallthru
      _
    // Predicated region
    $region34: #{tpu_custom_call.1} parent=1 // pred_check
      _
    $region35: #{tpu_custom_call.1} parent=1 // pred_check_branch
      %72 = sbr.rel (0) target = $region37
    $region36: #{tpu_custom_call.1} parent=1 // pred_region
      %73 = dma.done [#allocation6], 8192
    $region37: #{tpu_custom_call.1} parent=1 // pred_fallthru
      _
    // Predicated region
    $region38: #{tpu_custom_call.1} parent=1 // pred_check
      _
    $region39: #{tpu_custom_call.1} parent=1 // pred_check_branch
      %75 = sbr.rel (0) target = $region41
    $region40: #{tpu_custom_call.1} parent=1 // pred_region
      %76 = dma.done [#allocation9], 2048
    $region41: #{tpu_custom_call.1} parent=1 // pred_fallthru
      _
    %v77 = vld [vmem:[#allocation2] sm:$0xff]
    %v78 = vld [vmem:[#allocation5] sm:$0xff]
    %v79 = vld [vmem:[#allocation5 + $0x8] sm:$0xff]
    %v80 = vld [vmem:[#allocation5 + $0x10] sm:$0xff]
    %v81 = vld [vmem:[#allocation5 + $0x18] sm:$0xff]
    %v82 = vld [vmem:[#allocation5 + $0x20] sm:$0xff]
    %v83 = vld [vmem:[#allocation5 + $0x28] sm:$0xff]
    %v84 = vld [vmem:[#allocation5 + $0x30] sm:$0xff]
    %v85 = vld [vmem:[#allocation5 + $0x38] sm:$0xff]
    %v86 = vld [vmem:[%s3] sm:$0xf]
    %v88 = vlaneseq
    %v89 = vshrl.u32 %v88, 7
    %v90 = vsub.s32 0, %v89
    %v91 = vrot.slane %v86, %v90
    %v92 = vlaneseq
    %v93 = vshrl.u32 %v92, 7
    %v94 = vsub.s32 1, %v93
    %v95 = vrot.slane %v86, %v94
    %v96 = vlaneseq
    %v97 = vshrl.u32 %v96, 7
    %v98 = vsub.s32 2, %v97
    %v99 = vrot.slane %v86, %v98
    %v100 = vlaneseq
    %v101 = vshrl.u32 %v100, 7
    %v102 = vsub.s32 3, %v101
    %v103 = vrot.slane %v86, %v102
    %vm108 = vcmask 130048
    %v110 = vsel %vm108, %v77, 0
    %112 = vmatprep.subr.mxu0 0.0
    %113 = vmatpush1.msra.mxu0 0.0
    %114 = vmatprep.subr.mxu0 0.0
    %115 = vmatpush1.msra.mxu0 0.0
    %116 = vmatprep.subr.mxu0 0.0
    %117 = vmatpush1.msra.mxu0 0.0
    %118 = vmatprep.subr.mxu0 0.0
    %119 = vmatpush1.msra.mxu0 0.0
    %120 = vmatprep.subr.mxu0 0.0
    %121 = vmatpush1.msra.mxu0 0.0
    %122 = vmatprep.subr.mxu0 0.0
    %123 = vmatpush1.msra.mxu0 0.0
    %124 = vmatprep.subr.mxu0 0.0
    %125 = vmatpush1.msra.mxu0 0.0
    %126 = vmatprep.subr.mxu0 0.0
    %127 = vmatpush1.msra.mxu0 0.0
    %128 = vmatprep.subr.mxu0 0.0
    %129 = vmatpush1.msra.mxu0 0.0
    %130 = vmatprep.subr.mxu0 0.0
    %131 = vmatpush1.msra.mxu0 0.0
    %132 = vmatprep.subr.mxu0 0.0
    %133 = vmatpush1.msra.mxu0 0.0
    %134 = vmatprep.subr.mxu0 0.0
    %135 = vmatpush1.msra.mxu0 0.0
    %136 = vmatprep.subr.mxu0 0.0
    %137 = vmatpush1.msra.mxu0 0.0
    %138 = vmatprep.subr.mxu0 0.0
    %139 = vmatpush1.msra.mxu0 0.0
    %140 = vmatprep.subr.mxu0 %v83
    %141 = vmatpush1.msra.mxu0 %v82
    %142 = vmatprep.subr.mxu0 %v79
    %143 = vmatpush1.msra.mxu0 %v78
    %144 = vmatprep.subr.mxu0 0.0
    %145 = vmatpush2.msra.mxu0 0.0
    %146 = vmatprep.subr.mxu0 0.0
    %147 = vmatpush2.msra.mxu0 0.0
    %148 = vmatprep.subr.mxu0 0.0
    %149 = vmatpush2.msra.mxu0 0.0
    %150 = vmatprep.subr.mxu0 0.0
    %151 = vmatpush2.msra.mxu0 0.0
    %152 = vmatprep.subr.mxu0 0.0
    %153 = vmatpush2.msra.mxu0 0.0
    %154 = vmatprep.subr.mxu0 0.0
    %155 = vmatpush2.msra.mxu0 0.0
    %156 = vmatprep.subr.mxu0 0.0
    %157 = vmatpush2.msra.mxu0 0.0
    %158 = vmatprep.subr.mxu0 0.0
    %159 = vmatpush2.msra.mxu0 0.0
    %160 = vmatprep.subr.mxu0 0.0
    %161 = vmatpush2.msra.mxu0 0.0
    %162 = vmatprep.subr.mxu0 0.0
    %163 = vmatpush2.msra.mxu0 0.0
    %164 = vmatprep.subr.mxu0 0.0
    %165 = vmatpush2.msra.mxu0 0.0
    %166 = vmatprep.subr.mxu0 0.0
    %167 = vmatpush2.msra.mxu0 0.0
    %168 = vmatprep.subr.mxu0 0.0
    %169 = vmatpush2.msra.mxu0 0.0
    %170 = vmatprep.subr.mxu0 0.0
    %171 = vmatpush2.msra.mxu0 0.0
    %172 = vmatprep.subr.mxu0 0.0
    %173 = vmatpush2.msra.mxu0 0.0
    %174 = vmatprep.subr.mxu0 0.0
    %175 = vmatpush2.msra.mxu0 0.0
    %176 = vmatprep.mubr.f32.mxu0 0.0
    %177 = vmatmul.mubr.f32.gmra.mxu0 %v110
    %v178 = vpop.f32.mrf.mxu0
    %v179 = vadd.f32 %v91, %v178
    %v180 = vpop.f32.mrf.mxu0
    %v181 = vadd.f32 %v95, %v180
    %182 = vdwg.mxu0
    %183 = vmatprep.subr.mxu0 0.0
    %184 = vmatpush1.msra.mxu0 0.0
    %185 = vmatprep.subr.mxu0 0.0
    %186 = vmatpush1.msra.mxu0 0.0
    %187 = vmatprep.subr.mxu0 0.0
    %188 = vmatpush1.msra.mxu0 0.0
    %189 = vmatprep.subr.mxu0 0.0
    %190 = vmatpush1.msra.mxu0 0.0
    %191 = vmatprep.subr.mxu0 0.0
    %192 = vmatpush1.msra.mxu0 0.0
    %193 = vmatprep.subr.mxu0 0.0
    %194 = vmatpush1.msra.mxu0 0.0
    %195 = vmatprep.subr.mxu0 0.0
    %196 = vmatpush1.msra.mxu0 0.0
    %197 = vmatprep.subr.mxu0 0.0
    %198 = vmatpush1.msra.mxu0 0.0
    %199 = vmatprep.subr.mxu0 0.0
    %200 = vmatpush1.msra.mxu0 0.0
    %201 = vmatprep.subr.mxu0 0.0
    %202 = vmatpush1.msra.mxu0 0.0
    %203 = vmatprep.subr.mxu0 0.0
    %204 = vmatpush1.msra.mxu0 0.0
    %205 = vmatprep.subr.mxu0 0.0
    %206 = vmatpush1.msra.mxu0 0.0
    %207 = vmatprep.subr.mxu0 0.0
    %208 = vmatpush1.msra.mxu0 0.0
    %209 = vmatprep.subr.mxu0 0.0
    %210 = vmatpush1.msra.mxu0 0.0
    %211 = vmatprep.subr.mxu0 %v85
    %212 = vmatpush1.msra.mxu0 %v84
    %213 = vmatprep.subr.mxu0 %v81
    %214 = vmatpush1.msra.mxu0 %v80
    %215 = vmatprep.subr.mxu0 0.0
    %216 = vmatpush2.msra.mxu0 0.0
    %217 = vmatprep.subr.mxu0 0.0
    %218 = vmatpush2.msra.mxu0 0.0
    %219 = vmatprep.subr.mxu0 0.0
    %220 = vmatpush2.msra.mxu0 0.0
    %221 = vmatprep.subr.mxu0 0.0
    %222 = vmatpush2.msra.mxu0 0.0
    %223 = vmatprep.subr.mxu0 0.0
    %224 = vmatpush2.msra.mxu0 0.0
    %225 = vmatprep.subr.mxu0 0.0
    %226 = vmatpush2.msra.mxu0 0.0
    %227 = vmatprep.subr.mxu0 0.0
    %228 = vmatpush2.msra.mxu0 0.0
    %229 = vmatprep.subr.mxu0 0.0
    %230 = vmatpush2.msra.mxu0 0.0
    %231 = vmatprep.subr.mxu0 0.0
    %232 = vmatpush2.msra.mxu0 0.0
    %233 = vmatprep.subr.mxu0 0.0
    %234 = vmatpush2.msra.mxu0 0.0
    %235 = vmatprep.subr.mxu0 0.0
    %236 = vmatpush2.msra.mxu0 0.0
    %237 = vmatprep.subr.mxu0 0.0
    %238 = vmatpush2.msra.mxu0 0.0
    %239 = vmatprep.subr.mxu0 0.0
    %240 = vmatpush2.msra.mxu0 0.0
    %241 = vmatprep.subr.mxu0 0.0
    %242 = vmatpush2.msra.mxu0 0.0
    %243 = vmatprep.subr.mxu0 0.0
    %244 = vmatpush2.msra.mxu0 0.0
    %245 = vmatprep.subr.mxu0 0.0
    %246 = vmatpush2.msra.mxu0 0.0
    %247 = vmatprep.mubr.f32.mxu0 0.0
    %248 = vmatmul.mubr.f32.gmra.mxu0 %v110
    %v249 = vpop.f32.mrf.mxu0
    %v250 = vadd.f32 %v99, %v249
    %v251 = vpop.f32.mrf.mxu0
    %v252 = vadd.f32 %v103, %v251
    %253 = vdwg.mxu0
    %v254 = vld [vmem:[#allocation7] sm:$0xff]
    %v255 = vld [vmem:[#allocation7 + $0x8] sm:$0xff]
    %v256 = vld [vmem:[#allocation7 + $0x10] sm:$0xff]
    %v257 = vld [vmem:[#allocation7 + $0x18] sm:$0xff]
    %v258 = vld [vmem:[#allocation7 + $0x20] sm:$0xff]
    %v259 = vld [vmem:[#allocation7 + $0x28] sm:$0xff]
    %v260 = vld [vmem:[#allocation7 + $0x30] sm:$0xff]
    %v261 = vld [vmem:[#allocation7 + $0x38] sm:$0xff]
    %v262 = vld [vmem:[#allocation7 + $0x40] sm:$0xff]
    %v263 = vld [vmem:[#allocation7 + $0x48] sm:$0xff]
    %v264 = vld [vmem:[#allocation7 + $0x50] sm:$0xff]
    %v265 = vld [vmem:[#allocation7 + $0x58] sm:$0xff]
    %v266 = vld [vmem:[#allocation7 + $0x60] sm:$0xff]
    %v267 = vld [vmem:[#allocation7 + $0x68] sm:$0xff]
    %v268 = vld [vmem:[#allocation7 + $0x70] sm:$0xff]
    %v269 = vld [vmem:[#allocation7 + $0x78] sm:$0xff]
    %v270 = vld [vmem:[#allocation7 + $0x80] sm:$0xff]
    %v271 = vld [vmem:[#allocation7 + $0x88] sm:$0xff]
    %v272 = vld [vmem:[#allocation7 + $0x90] sm:$0xff]
    %v273 = vld [vmem:[#allocation7 + $0x98] sm:$0xff]
    %v274 = vld [vmem:[#allocation7 + $0xa0] sm:$0xff]
    %v275 = vld [vmem:[#allocation7 + $0xa8] sm:$0xff]
    %v276 = vld [vmem:[#allocation7 + $0xb0] sm:$0xff]
    %v277 = vld [vmem:[#allocation7 + $0xb8] sm:$0xff]
    %v278 = vld [vmem:[#allocation7 + $0xc0] sm:$0xff]
    %v279 = vld [vmem:[#allocation7 + $0xc8] sm:$0xff]
    %v280 = vld [vmem:[#allocation7 + $0xd0] sm:$0xff]
    %v281 = vld [vmem:[#allocation7 + $0xd8] sm:$0xff]
    %v282 = vld [vmem:[#allocation7 + $0xe0] sm:$0xff]
    %v283 = vld [vmem:[#allocation7 + $0xe8] sm:$0xff]
    %v284 = vld [vmem:[#allocation7 + $0xf0] sm:$0xff]
    %v285 = vld [vmem:[#allocation7 + $0xf8] sm:$0xff]
    %v286 = vld [vmem:[#allocation7 + $0x100] sm:$0xff]
    %v287 = vld [vmem:[#allocation7 + $0x108] sm:$0xff]
    %v288 = vld [vmem:[#allocation7 + $0x110] sm:$0xff]
    %v289 = vld [vmem:[#allocation7 + $0x118] sm:$0xff]
    %v290 = vld [vmem:[#allocation7 + $0x120] sm:$0xff]
    %v291 = vld [vmem:[#allocation7 + $0x128] sm:$0xff]
    %v292 = vld [vmem:[#allocation7 + $0x130] sm:$0xff]
    %v293 = vld [vmem:[#allocation7 + $0x138] sm:$0xff]
    %v294 = vld [vmem:[#allocation7 + $0x140] sm:$0xff]
    %v295 = vld [vmem:[#allocation7 + $0x148] sm:$0xff]
    %v296 = vld [vmem:[#allocation7 + $0x150] sm:$0xff]
    %v297 = vld [vmem:[#allocation7 + $0x158] sm:$0xff]
    %v298 = vld [vmem:[#allocation7 + $0x160] sm:$0xff]
    %v299 = vld [vmem:[#allocation7 + $0x168] sm:$0xff]
    %v300 = vld [vmem:[#allocation7 + $0x170] sm:$0xff]
    %v301 = vld [vmem:[#allocation7 + $0x178] sm:$0xff]
    %v302 = vld [vmem:[#allocation7 + $0x180] sm:$0xff]
    %v303 = vld [vmem:[#allocation7 + $0x188] sm:$0xff]
    %v304 = vld [vmem:[#allocation7 + $0x190] sm:$0xff]
    %v305 = vld [vmem:[#allocation7 + $0x198] sm:$0xff]
    %v306 = vld [vmem:[#allocation7 + $0x1a0] sm:$0xff]
    %v307 = vld [vmem:[#allocation7 + $0x1a8] sm:$0xff]
    %v308 = vld [vmem:[#allocation7 + $0x1b0] sm:$0xff]
    %v309 = vld [vmem:[#allocation7 + $0x1b8] sm:$0xff]
    %v310 = vld [vmem:[#allocation7 + $0x1c0] sm:$0xff]
    %v311 = vld [vmem:[#allocation7 + $0x1c8] sm:$0xff]
    %v312 = vld [vmem:[#allocation7 + $0x1d0] sm:$0xff]
    %v313 = vld [vmem:[#allocation7 + $0x1d8] sm:$0xff]
    %v314 = vld [vmem:[#allocation7 + $0x1e0] sm:$0xff]
    %v315 = vld [vmem:[#allocation7 + $0x1e8] sm:$0xff]
    %v316 = vld [vmem:[#allocation7 + $0x1f0] sm:$0xff]
    %v317 = vld [vmem:[#allocation7 + $0x1f8] sm:$0xff]
    %318 = vmatprep.subr.mxu0 %v315
    %319 = vmatpush1.msra.mxu0 %v314
    %320 = vmatprep.subr.mxu0 %v311
    %321 = vmatpush1.msra.mxu0 %v310
    %322 = vmatprep.subr.mxu0 %v307
    %323 = vmatpush1.msra.mxu0 %v306
    %324 = vmatprep.subr.mxu0 %v303
    %325 = vmatpush1.msra.mxu0 %v302
    %326 = vmatprep.subr.mxu0 %v299
    %327 = vmatpush1.msra.mxu0 %v298
    %328 = vmatprep.subr.mxu0 %v295
    %329 = vmatpush1.msra.mxu0 %v294
    %330 = vmatprep.subr.mxu0 %v291
    %331 = vmatpush1.msra.mxu0 %v290
    %332 = vmatprep.subr.mxu0 %v287
    %333 = vmatpush1.msra.mxu0 %v286
    %334 = vmatprep.subr.mxu0 %v283
    %335 = vmatpush1.msra.mxu0 %v282
    %336 = vmatprep.subr.mxu0 %v279
    %337 = vmatpush1.msra.mxu0 %v278
    %338 = vmatprep.subr.mxu0 %v275
    %339 = vmatpush1.msra.mxu0 %v274
    %340 = vmatprep.subr.mxu0 %v271
    %341 = vmatpush1.msra.mxu0 %v270
    %342 = vmatprep.subr.mxu0 %v267
    %343 = vmatpush1.msra.mxu0 %v266
    %344 = vmatprep.subr.mxu0 %v263
    %345 = vmatpush1.msra.mxu0 %v262
    %346 = vmatprep.subr.mxu0 %v259
    %347 = vmatpush1.msra.mxu0 %v258
    %348 = vmatprep.subr.mxu0 %v255
    %349 = vmatpush1.msra.mxu0 %v254
    %350 = vmatprep.subr.mxu0 0.0
    %351 = vmatpush2.msra.mxu0 0.0
    %352 = vmatprep.subr.mxu0 0.0
    %353 = vmatpush2.msra.mxu0 0.0
    %354 = vmatprep.subr.mxu0 0.0
    %355 = vmatpush2.msra.mxu0 0.0
    %356 = vmatprep.subr.mxu0 0.0
    %357 = vmatpush2.msra.mxu0 0.0
    %358 = vmatprep.subr.mxu0 0.0
    %359 = vmatpush2.msra.mxu0 0.0
    %360 = vmatprep.subr.mxu0 0.0
    %361 = vmatpush2.msra.mxu0 0.0
    %362 = vmatprep.subr.mxu0 0.0
    %363 = vmatpush2.msra.mxu0 0.0
    %364 = vmatprep.subr.mxu0 0.0
    %365 = vmatpush2.msra.mxu0 0.0
    %366 = vmatprep.subr.mxu0 0.0
    %367 = vmatpush2.msra.mxu0 0.0
    %368 = vmatprep.subr.mxu0 0.0
    %369 = vmatpush2.msra.mxu0 0.0
    %370 = vmatprep.subr.mxu0 0.0
    %371 = vmatpush2.msra.mxu0 0.0
    %372 = vmatprep.subr.mxu0 0.0
    %373 = vmatpush2.msra.mxu0 0.0
    %374 = vmatprep.subr.mxu0 0.0
    %375 = vmatpush2.msra.mxu0 0.0
    %376 = vmatprep.subr.mxu0 0.0
    %377 = vmatpush2.msra.mxu0 0.0
    %378 = vmatprep.subr.mxu0 0.0
    %379 = vmatpush2.msra.mxu0 0.0
    %380 = vmatprep.subr.mxu0 0.0
    %381 = vmatpush2.msra.mxu0 0.0
    %382 = vmatprep.mubr.f32.mxu0 0.0
    %383 = vmatmul.mubr.f32.gmra.mxu0 0.0
    %v384 = vpop.f32.mrf.mxu0
    %v385 = vadd.f32 0.0, %v384
    %v386 = vpop.f32.mrf.mxu0
    %v387 = vadd.f32 0.0, %v386
    %388 = vdwg.mxu0
    %389 = vmatprep.subr.mxu0 %v317
    %390 = vmatpush1.msra.mxu0 %v316
    %391 = vmatprep.subr.mxu0 %v313
    %392 = vmatpush1.msra.mxu0 %v312
    %393 = vmatprep.subr.mxu0 %v309
    %394 = vmatpush1.msra.mxu0 %v308
    %395 = vmatprep.subr.mxu0 %v305
    %396 = vmatpush1.msra.mxu0 %v304
    %397 = vmatprep.subr.mxu0 %v301
    %398 = vmatpush1.msra.mxu0 %v300
    %399 = vmatprep.subr.mxu0 %v297
    %400 = vmatpush1.msra.mxu0 %v296
    %401 = vmatprep.subr.mxu0 %v293
    %402 = vmatpush1.msra.mxu0 %v292
    %403 = vmatprep.subr.mxu0 %v289
    %404 = vmatpush1.msra.mxu0 %v288
    %405 = vmatprep.subr.mxu0 %v285
    %406 = vmatpush1.msra.mxu0 %v284
    %407 = vmatprep.subr.mxu0 %v281
    %408 = vmatpush1.msra.mxu0 %v280
    %409 = vmatprep.subr.mxu0 %v277
    %410 = vmatpush1.msra.mxu0 %v276
    %411 = vmatprep.subr.mxu0 %v273
    %412 = vmatpush1.msra.mxu0 %v272
    %413 = vmatprep.subr.mxu0 %v269
    %414 = vmatpush1.msra.mxu0 %v268
    %415 = vmatprep.subr.mxu0 %v265
    %416 = vmatpush1.msra.mxu0 %v264
    %417 = vmatprep.subr.mxu0 %v261
    %418 = vmatpush1.msra.mxu0 %v260
    %419 = vmatprep.subr.mxu0 %v257
    %420 = vmatpush1.msra.mxu0 %v256
    %421 = vmatprep.subr.mxu0 0.0
    %422 = vmatpush2.msra.mxu0 0.0
    %423 = vmatprep.subr.mxu0 0.0
    %424 = vmatpush2.msra.mxu0 0.0
    %425 = vmatprep.subr.mxu0 0.0
    %426 = vmatpush2.msra.mxu0 0.0
    %427 = vmatprep.subr.mxu0 0.0
    %428 = vmatpush2.msra.mxu0 0.0
    %429 = vmatprep.subr.mxu0 0.0
    %430 = vmatpush2.msra.mxu0 0.0
    %431 = vmatprep.subr.mxu0 0.0
    %432 = vmatpush2.msra.mxu0 0.0
    %433 = vmatprep.subr.mxu0 0.0
    %434 = vmatpush2.msra.mxu0 0.0
    %435 = vmatprep.subr.mxu0 0.0
    %436 = vmatpush2.msra.mxu0 0.0
    %437 = vmatprep.subr.mxu0 0.0
    %438 = vmatpush2.msra.mxu0 0.0
    %439 = vmatprep.subr.mxu0 0.0
    %440 = vmatpush2.msra.mxu0 0.0
    %441 = vmatprep.subr.mxu0 0.0
    %442 = vmatpush2.msra.mxu0 0.0
    %443 = vmatprep.subr.mxu0 0.0
    %444 = vmatpush2.msra.mxu0 0.0
    %445 = vmatprep.subr.mxu0 0.0
    %446 = vmatpush2.msra.mxu0 0.0
    %447 = vmatprep.subr.mxu0 0.0
    %448 = vmatpush2.msra.mxu0 0.0
    %449 = vmatprep.subr.mxu0 0.0
    %450 = vmatpush2.msra.mxu0 0.0
    %451 = vmatprep.subr.mxu0 0.0
    %452 = vmatpush2.msra.mxu0 0.0
    %453 = vmatprep.mubr.f32.mxu0 0.0
    %454 = vmatmul.mubr.f32.gmra.mxu0 0.0
    %v455 = vpop.f32.mrf.mxu0
    %v456 = vadd.f32 0.0, %v455
    %v457 = vpop.f32.mrf.mxu0
    %v458 = vadd.f32 0.0, %v457
    %459 = vdwg.mxu0
    %v460 = vadd.f32 %v179, %v385
    %v461 = vadd.f32 %v181, %v387
    %v462 = vadd.f32 %v250, %v456
    %v463 = vadd.f32 %v252, %v458
    %v464 = vxor.u32 %v460, 2147483648
    %v465 = vmul.f32 %v464, 1.442695
    %v466 = vpow.pop %v465
    %v467 = vadd.f32 %v466, 1.0
    %v468 = vrcp.pop %v467
    %v469 = vmul.f32 1.0, %v468
    %v470 = vxor.u32 %v461, 2147483648
    %v471 = vmul.f32 %v470, 1.442695
    %v472 = vpow.pop %v471
    %v473 = vadd.f32 %v472, 1.0
    %v474 = vrcp.pop %v473
    %v475 = vmul.f32 1.0, %v474
    %v476 = vtanh.pop %v462
    %v477 = vxor.u32 %v463, 2147483648
    %v478 = vmul.f32 %v477, 1.442695
    %v479 = vpow.pop %v478
    %v480 = vadd.f32 %v479, 1.0
    %v481 = vrcp.pop %v480
    %v482 = vmul.f32 1.0, %v481
    %v483 = vmul.f32 %v475, 0.0
    %v484 = vmul.f32 %v469, %v476
    %v485 = vadd.f32 %v483, %v484
    %v486 = vtanh.pop %v485
    %v487 = vmul.f32 %v482, %v486
    %488 = vmatprep.subr.mxu0 %v315
    %489 = vmatpush1.msra.mxu0 %v314
    %490 = vmatprep.subr.mxu0 %v311
    %491 = vmatpush1.msra.mxu0 %v310
    %492 = vmatprep.subr.mxu0 %v307
    %493 = vmatpush1.msra.mxu0 %v306
    %494 = vmatprep.subr.mxu0 %v303
    %495 = vmatpush1.msra.mxu0 %v302
    %496 = vmatprep.subr.mxu0 %v299
    %497 = vmatpush1.msra.mxu0 %v298
    %498 = vmatprep.subr.mxu0 %v295
    %499 = vmatpush1.msra.mxu0 %v294
    %500 = vmatprep.subr.mxu0 %v291
    %501 = vmatpush1.msra.mxu0 %v290
    %502 = vmatprep.subr.mxu0 %v287
    %503 = vmatpush1.msra.mxu0 %v286
    %504 = vmatprep.subr.mxu0 %v283
    %505 = vmatpush1.msra.mxu0 %v282
    %506 = vmatprep.subr.mxu0 %v279
    %507 = vmatpush1.msra.mxu0 %v278
    %508 = vmatprep.subr.mxu0 %v275
    %509 = vmatpush1.msra.mxu0 %v274
    %510 = vmatprep.subr.mxu0 %v271
    %511 = vmatpush1.msra.mxu0 %v270
    %512 = vmatprep.subr.mxu0 %v267
    %513 = vmatpush1.msra.mxu0 %v266
    %514 = vmatprep.subr.mxu0 %v263
    %515 = vmatpush1.msra.mxu0 %v262
    %516 = vmatprep.subr.mxu0 %v259
    %517 = vmatpush1.msra.mxu0 %v258
    %518 = vmatprep.subr.mxu0 %v255
    %519 = vmatpush1.msra.mxu0 %v254
    %520 = vmatprep.subr.mxu0 0.0
    %521 = vmatpush2.msra.mxu0 0.0
    %522 = vmatprep.subr.mxu0 0.0
    %523 = vmatpush2.msra.mxu0 0.0
    %524 = vmatprep.subr.mxu0 0.0
    %525 = vmatpush2.msra.mxu0 0.0
    %526 = vmatprep.subr.mxu0 0.0
    %527 = vmatpush2.msra.mxu0 0.0
    %528 = vmatprep.subr.mxu0 0.0
    %529 = vmatpush2.msra.mxu0 0.0
    %530 = vmatprep.subr.mxu0 0.0
    %531 = vmatpush2.msra.mxu0 0.0
    %532 = vmatprep.subr.mxu0 0.0
    %533 = vmatpush2.msra.mxu0 0.0
    %534 = vmatprep.subr.mxu0 0.0
    %535 = vmatpush2.msra.mxu0 0.0
    %536 = vmatprep.subr.mxu0 0.0
    %537 = vmatpush2.msra.mxu0 0.0
    %538 = vmatprep.subr.mxu0 0.0
    %539 = vmatpush2.msra.mxu0 0.0
    %540 = vmatprep.subr.mxu0 0.0
    %541 = vmatpush2.msra.mxu0 0.0
    %542 = vmatprep.subr.mxu0 0.0
    %543 = vmatpush2.msra.mxu0 0.0
    %544 = vmatprep.subr.mxu0 0.0
    %545 = vmatpush2.msra.mxu0 0.0
    %546 = vmatprep.subr.mxu0 0.0
    %547 = vmatpush2.msra.mxu0 0.0
    %548 = vmatprep.subr.mxu0 0.0
    %549 = vmatpush2.msra.mxu0 0.0
    %550 = vmatprep.subr.mxu0 0.0
    %551 = vmatpush2.msra.mxu0 0.0
    %552 = vmatprep.mubr.f32.mxu0 0.0
    %553 = vmatmul.mubr.f32.gmra.mxu0 %v487
    %v554 = vpop.f32.mrf.mxu0
    %v555 = vadd.f32 0.0, %v554
    %v556 = vpop.f32.mrf.mxu0
    %v557 = vadd.f32 0.0, %v556
    %558 = vdwg.mxu0
    %559 = vmatprep.subr.mxu0 %v317
    %560 = vmatpush1.msra.mxu0 %v316
    %561 = vmatprep.subr.mxu0 %v313
    %562 = vmatpush1.msra.mxu0 %v312
    %563 = vmatprep.subr.mxu0 %v309
    %564 = vmatpush1.msra.mxu0 %v308
    %565 = vmatprep.subr.mxu0 %v305
    %566 = vmatpush1.msra.mxu0 %v304
    %567 = vmatprep.subr.mxu0 %v301
    %568 = vmatpush1.msra.mxu0 %v300
    %569 = vmatprep.subr.mxu0 %v297
    %570 = vmatpush1.msra.mxu0 %v296
    %571 = vmatprep.subr.mxu0 %v293
    %572 = vmatpush1.msra.mxu0 %v292
    %573 = vmatprep.subr.mxu0 %v289
    %574 = vmatpush1.msra.mxu0 %v288
    %575 = vmatprep.subr.mxu0 %v285
    %576 = vmatpush1.msra.mxu0 %v284
    %577 = vmatprep.subr.mxu0 %v281
    %578 = vmatpush1.msra.mxu0 %v280
    %579 = vmatprep.subr.mxu0 %v277
    %580 = vmatpush1.msra.mxu0 %v276
    %581 = vmatprep.subr.mxu0 %v273
    %582 = vmatpush1.msra.mxu0 %v272
    %583 = vmatprep.subr.mxu0 %v269
    %584 = vmatpush1.msra.mxu0 %v268
    %585 = vmatprep.subr.mxu0 %v265
    %586 = vmatpush1.msra.mxu0 %v264
    %587 = vmatprep.subr.mxu0 %v261
    %588 = vmatpush1.msra.mxu0 %v260
    %589 = vmatprep.subr.mxu0 %v257
    %590 = vmatpush1.msra.mxu0 %v256
    %591 = vmatprep.subr.mxu0 0.0
    %592 = vmatpush2.msra.mxu0 0.0
    %593 = vmatprep.subr.mxu0 0.0
    %594 = vmatpush2.msra.mxu0 0.0
    %595 = vmatprep.subr.mxu0 0.0
    %596 = vmatpush2.msra.mxu0 0.0
    %597 = vmatprep.subr.mxu0 0.0
    %598 = vmatpush2.msra.mxu0 0.0
    %599 = vmatprep.subr.mxu0 0.0
    %600 = vmatpush2.msra.mxu0 0.0
    %601 = vmatprep.subr.mxu0 0.0
    %602 = vmatpush2.msra.mxu0 0.0
    %603 = vmatprep.subr.mxu0 0.0
    %604 = vmatpush2.msra.mxu0 0.0
    %605 = vmatprep.subr.mxu0 0.0
    %606 = vmatpush2.msra.mxu0 0.0
    %607 = vmatprep.subr.mxu0 0.0
    %608 = vmatpush2.msra.mxu0 0.0
    %609 = vmatprep.subr.mxu0 0.0
    %610 = vmatpush2.msra.mxu0 0.0
    %611 = vmatprep.subr.mxu0 0.0
    %612 = vmatpush2.msra.mxu0 0.0
    %613 = vmatprep.subr.mxu0 0.0
    %614 = vmatpush2.msra.mxu0 0.0
    %615 = vmatprep.subr.mxu0 0.0
    %616 = vmatpush2.msra.mxu0 0.0
    %617 = vmatprep.subr.mxu0 0.0
    %618 = vmatpush2.msra.mxu0 0.0
    %619 = vmatprep.subr.mxu0 0.0
    %620 = vmatpush2.msra.mxu0 0.0
    %621 = vmatprep.subr.mxu0 0.0
    %622 = vmatpush2.msra.mxu0 0.0
    %623 = vmatprep.mubr.f32.mxu0 0.0
    %624 = vmatmul.mubr.f32.gmra.mxu0 %v487
    %v625 = vpop.f32.mrf.mxu0
    %v626 = vadd.f32 0.0, %v625
    %v627 = vpop.f32.mrf.mxu0
    %v628 = vadd.f32 0.0, %v627
    %629 = vdwg.mxu0
    %v634 = vrot.slane %v555, 7
    %v635 = vrot.slane %v557, 7
    %v636 = vrot.slane %v626, 7
    %v637 = vrot.slane %v628, 7
    %v642 = vadd.f32 %v179, %v634
    %v643 = vadd.f32 %v181, %v635
    %v644 = vadd.f32 %v250, %v636
    %v645 = vadd.f32 %v252, %v637
    %v646 = vxor.u32 %v642, 2147483648
    %v647 = vmul.f32 %v646, 1.442695
    %v648 = vpow.pop %v647
    %v649 = vadd.f32 %v648, 1.0
    %v650 = vrcp.pop %v649
    %v651 = vmul.f32 1.0, %v650
    %v652 = vxor.u32 %v643, 2147483648
    %v653 = vmul.f32 %v652, 1.442695
    %v654 = vpow.pop %v653
    %v655 = vadd.f32 %v654, 1.0
    %v656 = vrcp.pop %v655
    %v657 = vmul.f32 1.0, %v656
    %v658 = vtanh.pop %v644
    %v659 = vxor.u32 %v645, 2147483648
    %v660 = vmul.f32 %v659, 1.442695
    %v661 = vpow.pop %v660
    %v662 = vadd.f32 %v661, 1.0
    %v663 = vrcp.pop %v662
    %v664 = vmul.f32 1.0, %v663
    %v666 = vrot.slane %v485, 7
    %v668 = vmul.f32 %v657, %v666
    %v669 = vmul.f32 %v651, %v658
    %v670 = vadd.f32 %v668, %v669
    %v671 = vtanh.pop %v670
    %v672 = vmul.f32 %v664, %v671
    %v674 = vrot.slane %v672, 1
    %676 = vmatprep.subr.mxu0 %v315
    %677 = vmatpush1.msra.mxu0 %v314
    %678 = vmatprep.subr.mxu0 %v311
    %679 = vmatpush1.msra.mxu0 %v310
    %680 = vmatprep.subr.mxu0 %v307
    %681 = vmatpush1.msra.mxu0 %v306
    %682 = vmatprep.subr.mxu0 %v303
    %683 = vmatpush1.msra.mxu0 %v302
    %684 = vmatprep.subr.mxu0 %v299
    %685 = vmatpush1.msra.mxu0 %v298
    %686 = vmatprep.subr.mxu0 %v295
    %687 = vmatpush1.msra.mxu0 %v294
    %688 = vmatprep.subr.mxu0 %v291
    %689 = vmatpush1.msra.mxu0 %v290
    %690 = vmatprep.subr.mxu0 %v287
    %691 = vmatpush1.msra.mxu0 %v286
    %692 = vmatprep.subr.mxu0 %v283
    %693 = vmatpush1.msra.mxu0 %v282
    %694 = vmatprep.subr.mxu0 %v279
    %695 = vmatpush1.msra.mxu0 %v278
    %696 = vmatprep.subr.mxu0 %v275
    %697 = vmatpush1.msra.mxu0 %v274
    %698 = vmatprep.subr.mxu0 %v271
    %699 = vmatpush1.msra.mxu0 %v270
    %700 = vmatprep.subr.mxu0 %v267
    %701 = vmatpush1.msra.mxu0 %v266
    %702 = vmatprep.subr.mxu0 %v263
    %703 = vmatpush1.msra.mxu0 %v262
    %704 = vmatprep.subr.mxu0 %v259
    %705 = vmatpush1.msra.mxu0 %v258
    %706 = vmatprep.subr.mxu0 %v255
    %707 = vmatpush1.msra.mxu0 %v254
    %708 = vmatprep.subr.mxu0 0.0
    %709 = vmatpush2.msra.mxu0 0.0
    %710 = vmatprep.subr.mxu0 0.0
    %711 = vmatpush2.msra.mxu0 0.0
    %712 = vmatprep.subr.mxu0 0.0
    %713 = vmatpush2.msra.mxu0 0.0
    %714 = vmatprep.subr.mxu0 0.0
    %715 = vmatpush2.msra.mxu0 0.0
    %716 = vmatprep.subr.mxu0 0.0
    %717 = vmatpush2.msra.mxu0 0.0
    %718 = vmatprep.subr.mxu0 0.0
    %719 = vmatpush2.msra.mxu0 0.0
    %720 = vmatprep.subr.mxu0 0.0
    %721 = vmatpush2.msra.mxu0 0.0
    %722 = vmatprep.subr.mxu0 0.0
    %723 = vmatpush2.msra.mxu0 0.0
    %724 = vmatprep.subr.mxu0 0.0
    %725 = vmatpush2.msra.mxu0 0.0
    %726 = vmatprep.subr.mxu0 0.0
    %727 = vmatpush2.msra.mxu0 0.0
    %728 = vmatprep.subr.mxu0 0.0
    %729 = vmatpush2.msra.mxu0 0.0
    %730 = vmatprep.subr.mxu0 0.0
    %731 = vmatpush2.msra.mxu0 0.0
    %732 = vmatprep.subr.mxu0 0.0
    %733 = vmatpush2.msra.mxu0 0.0
    %734 = vmatprep.subr.mxu0 0.0
    %735 = vmatpush2.msra.mxu0 0.0
    %736 = vmatprep.subr.mxu0 0.0
    %737 = vmatpush2.msra.mxu0 0.0
    %738 = vmatprep.subr.mxu0 0.0
    %739 = vmatpush2.msra.mxu0 0.0
    %740 = vmatprep.mubr.f32.mxu0 0.0
    %741 = vmatmul.mubr.f32.gmra.mxu0 %v674
    %v742 = vpop.f32.mrf.mxu0
    %v743 = vadd.f32 0.0, %v742
    %v744 = vpop.f32.mrf.mxu0
    %v745 = vadd.f32 0.0, %v744
    %746 = vdwg.mxu0
    %747 = vmatprep.subr.mxu0 %v317
    %748 = vmatpush1.msra.mxu0 %v316
    %749 = vmatprep.subr.mxu0 %v313
    %750 = vmatpush1.msra.mxu0 %v312
    %751 = vmatprep.subr.mxu0 %v309
    %752 = vmatpush1.msra.mxu0 %v308
    %753 = vmatprep.subr.mxu0 %v305
    %754 = vmatpush1.msra.mxu0 %v304
    %755 = vmatprep.subr.mxu0 %v301
    %756 = vmatpush1.msra.mxu0 %v300
    %757 = vmatprep.subr.mxu0 %v297
    %758 = vmatpush1.msra.mxu0 %v296
    %759 = vmatprep.subr.mxu0 %v293
    %760 = vmatpush1.msra.mxu0 %v292
    %761 = vmatprep.subr.mxu0 %v289
    %762 = vmatpush1.msra.mxu0 %v288
    %763 = vmatprep.subr.mxu0 %v285
    %764 = vmatpush1.msra.mxu0 %v284
    %765 = vmatprep.subr.mxu0 %v281
    %766 = vmatpush1.msra.mxu0 %v280
    %767 = vmatprep.subr.mxu0 %v277
    %768 = vmatpush1.msra.mxu0 %v276
    %769 = vmatprep.subr.mxu0 %v273
    %770 = vmatpush1.msra.mxu0 %v272
    %771 = vmatprep.subr.mxu0 %v269
    %772 = vmatpush1.msra.mxu0 %v268
    %773 = vmatprep.subr.mxu0 %v265
    %774 = vmatpush1.msra.mxu0 %v264
    %775 = vmatprep.subr.mxu0 %v261
    %776 = vmatpush1.msra.mxu0 %v260
    %777 = vmatprep.subr.mxu0 %v257
    %778 = vmatpush1.msra.mxu0 %v256
    %779 = vmatprep.subr.mxu0 0.0
    %780 = vmatpush2.msra.mxu0 0.0
    %781 = vmatprep.subr.mxu0 0.0
    %782 = vmatpush2.msra.mxu0 0.0
    %783 = vmatprep.subr.mxu0 0.0
    %784 = vmatpush2.msra.mxu0 0.0
    %785 = vmatprep.subr.mxu0 0.0
    %786 = vmatpush2.msra.mxu0 0.0
    %787 = vmatprep.subr.mxu0 0.0
    %788 = vmatpush2.msra.mxu0 0.0
    %789 = vmatprep.subr.mxu0 0.0
    %790 = vmatpush2.msra.mxu0 0.0
    %791 = vmatprep.subr.mxu0 0.0
    %792 = vmatpush2.msra.mxu0 0.0
    %793 = vmatprep.subr.mxu0 0.0
    %794 = vmatpush2.msra.mxu0 0.0
    %795 = vmatprep.subr.mxu0 0.0
    %796 = vmatpush2.msra.mxu0 0.0
    %797 = vmatprep.subr.mxu0 0.0
    %798 = vmatpush2.msra.mxu0 0.0
    %799 = vmatprep.subr.mxu0 0.0
    %800 = vmatpush2.msra.mxu0 0.0
    %801 = vmatprep.subr.mxu0 0.0
    %802 = vmatpush2.msra.mxu0 0.0
    %803 = vmatprep.subr.mxu0 0.0
    %804 = vmatpush2.msra.mxu0 0.0
    %805 = vmatprep.subr.mxu0 0.0
    %806 = vmatpush2.msra.mxu0 0.0
    %807 = vmatprep.subr.mxu0 0.0
    %808 = vmatpush2.msra.mxu0 0.0
    %809 = vmatprep.subr.mxu0 0.0
    %810 = vmatpush2.msra.mxu0 0.0
    %811 = vmatprep.mubr.f32.mxu0 0.0
    %812 = vmatmul.mubr.f32.gmra.mxu0 %v674
    %v813 = vpop.f32.mrf.mxu0
    %v814 = vadd.f32 0.0, %v813
    %v815 = vpop.f32.mrf.mxu0
    %v816 = vadd.f32 0.0, %v815
    %817 = vdwg.mxu0
    %v822 = vrot.slane %v743, 6
    %v823 = vrot.slane %v745, 6
    %v824 = vrot.slane %v814, 6
    %v825 = vrot.slane %v816, 6
    %v830 = vadd.f32 %v179, %v822
    %v831 = vadd.f32 %v181, %v823
    %v832 = vadd.f32 %v250, %v824
    %v833 = vadd.f32 %v252, %v825
    %v834 = vxor.u32 %v830, 2147483648
    %v835 = vmul.f32 %v834, 1.442695
    %v836 = vpow.pop %v835
    %v837 = vadd.f32 %v836, 1.0
    %v838 = vrcp.pop %v837
    %v839 = vmul.f32 1.0, %v838
    %v840 = vxor.u32 %v831, 2147483648
    %v841 = vmul.f32 %v840, 1.442695
    %v842 = vpow.pop %v841
    %v843 = vadd.f32 %v842, 1.0
    %v844 = vrcp.pop %v843
    %v845 = vmul.f32 1.0, %v844
    %v846 = vtanh.pop %v832
    %v847 = vxor.u32 %v833, 2147483648
    %v848 = vmul.f32 %v847, 1.442695
    %v849 = vpow.pop %v848
    %v850 = vadd.f32 %v849, 1.0
    %v851 = vrcp.pop %v850
    %v852 = vmul.f32 1.0, %v851
    %v854 = vrot.slane %v670, 7
    %v856 = vmul.f32 %v845, %v854
    %v857 = vmul.f32 %v839, %v846
    %v858 = vadd.f32 %v856, %v857
    %v859 = vtanh.pop %v858
    %v860 = vmul.f32 %v852, %v859
    %v862 = vrot.slane %v860, 2
    %864 = vmatprep.subr.mxu0 %v315
    %865 = vmatpush1.msra.mxu0 %v314
    %866 = vmatprep.subr.mxu0 %v311
    %867 = vmatpush1.msra.mxu0 %v310
    %868 = vmatprep.subr.mxu0 %v307
    %869 = vmatpush1.msra.mxu0 %v306
    %870 = vmatprep.subr.mxu0 %v303
    %871 = vmatpush1.msra.mxu0 %v302
    %872 = vmatprep.subr.mxu0 %v299
    %873 = vmatpush1.msra.mxu0 %v298
    %874 = vmatprep.subr.mxu0 %v295
    %875 = vmatpush1.msra.mxu0 %v294
    %876 = vmatprep.subr.mxu0 %v291
    %877 = vmatpush1.msra.mxu0 %v290
    %878 = vmatprep.subr.mxu0 %v287
    %879 = vmatpush1.msra.mxu0 %v286
    %880 = vmatprep.subr.mxu0 %v283
    %881 = vmatpush1.msra.mxu0 %v282
    %882 = vmatprep.subr.mxu0 %v279
    %883 = vmatpush1.msra.mxu0 %v278
    %884 = vmatprep.subr.mxu0 %v275
    %885 = vmatpush1.msra.mxu0 %v274
    %886 = vmatprep.subr.mxu0 %v271
    %887 = vmatpush1.msra.mxu0 %v270
    %888 = vmatprep.subr.mxu0 %v267
    %889 = vmatpush1.msra.mxu0 %v266
    %890 = vmatprep.subr.mxu0 %v263
    %891 = vmatpush1.msra.mxu0 %v262
    %892 = vmatprep.subr.mxu0 %v259
    %893 = vmatpush1.msra.mxu0 %v258
    %894 = vmatprep.subr.mxu0 %v255
    %895 = vmatpush1.msra.mxu0 %v254
    %896 = vmatprep.subr.mxu0 0.0
    %897 = vmatpush2.msra.mxu0 0.0
    %898 = vmatprep.subr.mxu0 0.0
    %899 = vmatpush2.msra.mxu0 0.0
    %900 = vmatprep.subr.mxu0 0.0
    %901 = vmatpush2.msra.mxu0 0.0
    %902 = vmatprep.subr.mxu0 0.0
    %903 = vmatpush2.msra.mxu0 0.0
    %904 = vmatprep.subr.mxu0 0.0
    %905 = vmatpush2.msra.mxu0 0.0
    %906 = vmatprep.subr.mxu0 0.0
    %907 = vmatpush2.msra.mxu0 0.0
    %908 = vmatprep.subr.mxu0 0.0
    %909 = vmatpush2.msra.mxu0 0.0
    %910 = vmatprep.subr.mxu0 0.0
    %911 = vmatpush2.msra.mxu0 0.0
    %912 = vmatprep.subr.mxu0 0.0
    %913 = vmatpush2.msra.mxu0 0.0
    %914 = vmatprep.subr.mxu0 0.0
    %915 = vmatpush2.msra.mxu0 0.0
    %916 = vmatprep.subr.mxu0 0.0
    %917 = vmatpush2.msra.mxu0 0.0
    %918 = vmatprep.subr.mxu0 0.0
    %919 = vmatpush2.msra.mxu0 0.0
    %920 = vmatprep.subr.mxu0 0.0
    %921 = vmatpush2.msra.mxu0 0.0
    %922 = vmatprep.subr.mxu0 0.0
    %923 = vmatpush2.msra.mxu0 0.0
    %924 = vmatprep.subr.mxu0 0.0
    %925 = vmatpush2.msra.mxu0 0.0
    %926 = vmatprep.subr.mxu0 0.0
    %927 = vmatpush2.msra.mxu0 0.0
    %928 = vmatprep.mubr.f32.mxu0 0.0
    %929 = vmatmul.mubr.f32.gmra.mxu0 %v862
    %v930 = vpop.f32.mrf.mxu0
    %v931 = vadd.f32 0.0, %v930
    %v932 = vpop.f32.mrf.mxu0
    %v933 = vadd.f32 0.0, %v932
    %934 = vdwg.mxu0
    %935 = vmatprep.subr.mxu0 %v317
    %936 = vmatpush1.msra.mxu0 %v316
    %937 = vmatprep.subr.mxu0 %v313
    %938 = vmatpush1.msra.mxu0 %v312
    %939 = vmatprep.subr.mxu0 %v309
    %940 = vmatpush1.msra.mxu0 %v308
    %941 = vmatprep.subr.mxu0 %v305
    %942 = vmatpush1.msra.mxu0 %v304
    %943 = vmatprep.subr.mxu0 %v301
    %944 = vmatpush1.msra.mxu0 %v300
    %945 = vmatprep.subr.mxu0 %v297
    %946 = vmatpush1.msra.mxu0 %v296
    %947 = vmatprep.subr.mxu0 %v293
    %948 = vmatpush1.msra.mxu0 %v292
    %949 = vmatprep.subr.mxu0 %v289
    %950 = vmatpush1.msra.mxu0 %v288
    %951 = vmatprep.subr.mxu0 %v285
    %952 = vmatpush1.msra.mxu0 %v284
    %953 = vmatprep.subr.mxu0 %v281
    %954 = vmatpush1.msra.mxu0 %v280
    %955 = vmatprep.subr.mxu0 %v277
    %956 = vmatpush1.msra.mxu0 %v276
    %957 = vmatprep.subr.mxu0 %v273
    %958 = vmatpush1.msra.mxu0 %v272
    %959 = vmatprep.subr.mxu0 %v269
    %960 = vmatpush1.msra.mxu0 %v268
    %961 = vmatprep.subr.mxu0 %v265
    %962 = vmatpush1.msra.mxu0 %v264
    %963 = vmatprep.subr.mxu0 %v261
    %964 = vmatpush1.msra.mxu0 %v260
    %965 = vmatprep.subr.mxu0 %v257
    %966 = vmatpush1.msra.mxu0 %v256
    %967 = vmatprep.subr.mxu0 0.0
    %968 = vmatpush2.msra.mxu0 0.0
    %969 = vmatprep.subr.mxu0 0.0
    %970 = vmatpush2.msra.mxu0 0.0
    %971 = vmatprep.subr.mxu0 0.0
    %972 = vmatpush2.msra.mxu0 0.0
    %973 = vmatprep.subr.mxu0 0.0
    %974 = vmatpush2.msra.mxu0 0.0
    %975 = vmatprep.subr.mxu0 0.0
    %976 = vmatpush2.msra.mxu0 0.0
    %977 = vmatprep.subr.mxu0 0.0
    %978 = vmatpush2.msra.mxu0 0.0
    %979 = vmatprep.subr.mxu0 0.0
    %980 = vmatpush2.msra.mxu0 0.0
    %981 = vmatprep.subr.mxu0 0.0
    %982 = vmatpush2.msra.mxu0 0.0
    %983 = vmatprep.subr.mxu0 0.0
    %984 = vmatpush2.msra.mxu0 0.0
    %985 = vmatprep.subr.mxu0 0.0
    %986 = vmatpush2.msra.mxu0 0.0
    %987 = vmatprep.subr.mxu0 0.0
    %988 = vmatpush2.msra.mxu0 0.0
    %989 = vmatprep.subr.mxu0 0.0
    %990 = vmatpush2.msra.mxu0 0.0
    %991 = vmatprep.subr.mxu0 0.0
    %992 = vmatpush2.msra.mxu0 0.0
    %993 = vmatprep.subr.mxu0 0.0
    %994 = vmatpush2.msra.mxu0 0.0
    %995 = vmatprep.subr.mxu0 0.0
    %996 = vmatpush2.msra.mxu0 0.0
    %997 = vmatprep.subr.mxu0 0.0
    %998 = vmatpush2.msra.mxu0 0.0
    %999 = vmatprep.mubr.f32.mxu0 0.0
    %1000 = vmatmul.mubr.f32.gmra.mxu0 %v862
    %v1001 = vpop.f32.mrf.mxu0
    %v1002 = vadd.f32 0.0, %v1001
    %v1003 = vpop.f32.mrf.mxu0
    %v1004 = vadd.f32 0.0, %v1003
    %1005 = vdwg.mxu0
    %v1010 = vrot.slane %v931, 5
    %v1011 = vrot.slane %v933, 5
    %v1012 = vrot.slane %v1002, 5
    %v1013 = vrot.slane %v1004, 5
    %v1018 = vadd.f32 %v179, %v1010
    %v1019 = vadd.f32 %v181, %v1011
    %v1020 = vadd.f32 %v250, %v1012
    %v1021 = vadd.f32 %v252, %v1013
    %v1022 = vxor.u32 %v1018, 2147483648
    %v1023 = vmul.f32 %v1022, 1.442695
    %v1024 = vpow.pop %v1023
    %v1025 = vadd.f32 %v1024, 1.0
    %v1026 = vrcp.pop %v1025
    %v1027 = vmul.f32 1.0, %v1026
    %v1028 = vxor.u32 %v1019, 2147483648
    %v1029 = vmul.f32 %v1028, 1.442695
    %v1030 = vpow.pop %v1029
    %v1031 = vadd.f32 %v1030, 1.0
    %v1032 = vrcp.pop %v1031
    %v1033 = vmul.f32 1.0, %v1032
    %v1034 = vtanh.pop %v1020
    %v1035 = vxor.u32 %v1021, 2147483648
    %v1036 = vmul.f32 %v1035, 1.442695
    %v1037 = vpow.pop %v1036
    %v1038 = vadd.f32 %v1037, 1.0
    %v1039 = vrcp.pop %v1038
    %v1040 = vmul.f32 1.0, %v1039
    %v1042 = vrot.slane %v858, 7
    %v1044 = vmul.f32 %v1033, %v1042
    %v1045 = vmul.f32 %v1027, %v1034
    %v1046 = vadd.f32 %v1044, %v1045
    %v1047 = vtanh.pop %v1046
    %v1048 = vmul.f32 %v1040, %v1047
    %v1050 = vrot.slane %v1048, 3
    %1052 = vmatprep.subr.mxu0 %v315
    %1053 = vmatpush1.msra.mxu0 %v314
    %1054 = vmatprep.subr.mxu0 %v311
    %1055 = vmatpush1.msra.mxu0 %v310
    %1056 = vmatprep.subr.mxu0 %v307
    %1057 = vmatpush1.msra.mxu0 %v306
    %1058 = vmatprep.subr.mxu0 %v303
    %1059 = vmatpush1.msra.mxu0 %v302
    %1060 = vmatprep.subr.mxu0 %v299
    %1061 = vmatpush1.msra.mxu0 %v298
    %1062 = vmatprep.subr.mxu0 %v295
    %1063 = vmatpush1.msra.mxu0 %v294
    %1064 = vmatprep.subr.mxu0 %v291
    %1065 = vmatpush1.msra.mxu0 %v290
    %1066 = vmatprep.subr.mxu0 %v287
    %1067 = vmatpush1.msra.mxu0 %v286
    %1068 = vmatprep.subr.mxu0 %v283
    %1069 = vmatpush1.msra.mxu0 %v282
    %1070 = vmatprep.subr.mxu0 %v279
    %1071 = vmatpush1.msra.mxu0 %v278
    %1072 = vmatprep.subr.mxu0 %v275
    %1073 = vmatpush1.msra.mxu0 %v274
    %1074 = vmatprep.subr.mxu0 %v271
    %1075 = vmatpush1.msra.mxu0 %v270
    %1076 = vmatprep.subr.mxu0 %v267
    %1077 = vmatpush1.msra.mxu0 %v266
    %1078 = vmatprep.subr.mxu0 %v263
    %1079 = vmatpush1.msra.mxu0 %v262
    %1080 = vmatprep.subr.mxu0 %v259
    %1081 = vmatpush1.msra.mxu0 %v258
    %1082 = vmatprep.subr.mxu0 %v255
    %1083 = vmatpush1.msra.mxu0 %v254
    %1084 = vmatprep.subr.mxu0 0.0
    %1085 = vmatpush2.msra.mxu0 0.0
    %1086 = vmatprep.subr.mxu0 0.0
    %1087 = vmatpush2.msra.mxu0 0.0
    %1088 = vmatprep.subr.mxu0 0.0
    %1089 = vmatpush2.msra.mxu0 0.0
    %1090 = vmatprep.subr.mxu0 0.0
    %1091 = vmatpush2.msra.mxu0 0.0
    %1092 = vmatprep.subr.mxu0 0.0
    %1093 = vmatpush2.msra.mxu0 0.0
    %1094 = vmatprep.subr.mxu0 0.0
    %1095 = vmatpush2.msra.mxu0 0.0
    %1096 = vmatprep.subr.mxu0 0.0
    %1097 = vmatpush2.msra.mxu0 0.0
    %1098 = vmatprep.subr.mxu0 0.0
    %1099 = vmatpush2.msra.mxu0 0.0
    %1100 = vmatprep.subr.mxu0 0.0
    %1101 = vmatpush2.msra.mxu0 0.0
    %1102 = vmatprep.subr.mxu0 0.0
    %1103 = vmatpush2.msra.mxu0 0.0
    %1104 = vmatprep.subr.mxu0 0.0
    %1105 = vmatpush2.msra.mxu0 0.0
    %1106 = vmatprep.subr.mxu0 0.0
    %1107 = vmatpush2.msra.mxu0 0.0
    %1108 = vmatprep.subr.mxu0 0.0
    %1109 = vmatpush2.msra.mxu0 0.0
    %1110 = vmatprep.subr.mxu0 0.0
    %1111 = vmatpush2.msra.mxu0 0.0
    %1112 = vmatprep.subr.mxu0 0.0
    %1113 = vmatpush2.msra.mxu0 0.0
    %1114 = vmatprep.subr.mxu0 0.0
    %1115 = vmatpush2.msra.mxu0 0.0
    %1116 = vmatprep.mubr.f32.mxu0 0.0
    %1117 = vmatmul.mubr.f32.gmra.mxu0 %v1050
    %v1118 = vpop.f32.mrf.mxu0
    %v1119 = vadd.f32 0.0, %v1118
    %v1120 = vpop.f32.mrf.mxu0
    %v1121 = vadd.f32 0.0, %v1120
    %1122 = vdwg.mxu0
    %1123 = vmatprep.subr.mxu0 %v317
    %1124 = vmatpush1.msra.mxu0 %v316
    %1125 = vmatprep.subr.mxu0 %v313
    %1126 = vmatpush1.msra.mxu0 %v312
    %1127 = vmatprep.subr.mxu0 %v309
    %1128 = vmatpush1.msra.mxu0 %v308
    %1129 = vmatprep.subr.mxu0 %v305
    %1130 = vmatpush1.msra.mxu0 %v304
    %1131 = vmatprep.subr.mxu0 %v301
    %1132 = vmatpush1.msra.mxu0 %v300
    %1133 = vmatprep.subr.mxu0 %v297
    %1134 = vmatpush1.msra.mxu0 %v296
    %1135 = vmatprep.subr.mxu0 %v293
    %1136 = vmatpush1.msra.mxu0 %v292
    %1137 = vmatprep.subr.mxu0 %v289
    %1138 = vmatpush1.msra.mxu0 %v288
    %1139 = vmatprep.subr.mxu0 %v285
    %1140 = vmatpush1.msra.mxu0 %v284
    %1141 = vmatprep.subr.mxu0 %v281
    %1142 = vmatpush1.msra.mxu0 %v280
    %1143 = vmatprep.subr.mxu0 %v277
    %1144 = vmatpush1.msra.mxu0 %v276
    %1145 = vmatprep.subr.mxu0 %v273
    %1146 = vmatpush1.msra.mxu0 %v272
    %1147 = vmatprep.subr.mxu0 %v269
    %1148 = vmatpush1.msra.mxu0 %v268
    %1149 = vmatprep.subr.mxu0 %v265
    %1150 = vmatpush1.msra.mxu0 %v264
    %1151 = vmatprep.subr.mxu0 %v261
    %1152 = vmatpush1.msra.mxu0 %v260
    %1153 = vmatprep.subr.mxu0 %v257
    %1154 = vmatpush1.msra.mxu0 %v256
    %1155 = vmatprep.subr.mxu0 0.0
    %1156 = vmatpush2.msra.mxu0 0.0
    %1157 = vmatprep.subr.mxu0 0.0
    %1158 = vmatpush2.msra.mxu0 0.0
    %1159 = vmatprep.subr.mxu0 0.0
    %1160 = vmatpush2.msra.mxu0 0.0
    %1161 = vmatprep.subr.mxu0 0.0
    %1162 = vmatpush2.msra.mxu0 0.0
    %1163 = vmatprep.subr.mxu0 0.0
    %1164 = vmatpush2.msra.mxu0 0.0
    %1165 = vmatprep.subr.mxu0 0.0
    %1166 = vmatpush2.msra.mxu0 0.0
    %1167 = vmatprep.subr.mxu0 0.0
    %1168 = vmatpush2.msra.mxu0 0.0
    %1169 = vmatprep.subr.mxu0 0.0
    %1170 = vmatpush2.msra.mxu0 0.0
    %1171 = vmatprep.subr.mxu0 0.0
    %1172 = vmatpush2.msra.mxu0 0.0
    %1173 = vmatprep.subr.mxu0 0.0
    %1174 = vmatpush2.msra.mxu0 0.0
    %1175 = vmatprep.subr.mxu0 0.0
    %1176 = vmatpush2.msra.mxu0 0.0
    %1177 = vmatprep.subr.mxu0 0.0
    %1178 = vmatpush2.msra.mxu0 0.0
    %1179 = vmatprep.subr.mxu0 0.0
    %1180 = vmatpush2.msra.mxu0 0.0
    %1181 = vmatprep.subr.mxu0 0.0
    %1182 = vmatpush2.msra.mxu0 0.0
    %1183 = vmatprep.subr.mxu0 0.0
    %1184 = vmatpush2.msra.mxu0 0.0
    %1185 = vmatprep.subr.mxu0 0.0
    %1186 = vmatpush2.msra.mxu0 0.0
    %1187 = vmatprep.mubr.f32.mxu0 0.0
    %1188 = vmatmul.mubr.f32.gmra.mxu0 %v1050
    %v1189 = vpop.f32.mrf.mxu0
    %v1190 = vadd.f32 0.0, %v1189
    %v1191 = vpop.f32.mrf.mxu0
    %v1192 = vadd.f32 0.0, %v1191
    %1193 = vdwg.mxu0
    %v1198 = vrot.slane %v1119, 4
    %v1199 = vrot.slane %v1121, 4
    %v1200 = vrot.slane %v1190, 4
    %v1201 = vrot.slane %v1192, 4
    %v1206 = vadd.f32 %v179, %v1198
    %v1207 = vadd.f32 %v181, %v1199
    %v1208 = vadd.f32 %v250, %v1200
    %v1209 = vadd.f32 %v252, %v1201
    %v1210 = vxor.u32 %v1206, 2147483648
    %v1211 = vmul.f32 %v1210, 1.442695
    %v1212 = vpow.pop %v1211
    %v1213 = vadd.f32 %v1212, 1.0
    %v1214 = vrcp.pop %v1213
    %v1215 = vmul.f32 1.0, %v1214
    %v1216 = vxor.u32 %v1207, 2147483648
    %v1217 = vmul.f32 %v1216, 1.442695
    %v1218 = vpow.pop %v1217
    %v1219 = vadd.f32 %v1218, 1.0
    %v1220 = vrcp.pop %v1219
    %v1221 = vmul.f32 1.0, %v1220
    %v1222 = vtanh.pop %v1208
    %v1223 = vxor.u32 %v1209, 2147483648
    %v1224 = vmul.f32 %v1223, 1.442695
    %v1225 = vpow.pop %v1224
    %v1226 = vadd.f32 %v1225, 1.0
    %v1227 = vrcp.pop %v1226
    %v1228 = vmul.f32 1.0, %v1227
    %v1230 = vrot.slane %v1046, 7
    %v1232 = vmul.f32 %v1221, %v1230
    %v1233 = vmul.f32 %v1215, %v1222
    %v1234 = vadd.f32 %v1232, %v1233
    %v1235 = vtanh.pop %v1234
    %v1236 = vmul.f32 %v1228, %v1235
    %v1238 = vrot.slane %v1236, 4
    %1240 = vmatprep.subr.mxu0 %v315
    %1241 = vmatpush1.msra.mxu0 %v314
    %1242 = vmatprep.subr.mxu0 %v311
    %1243 = vmatpush1.msra.mxu0 %v310
    %1244 = vmatprep.subr.mxu0 %v307
    %1245 = vmatpush1.msra.mxu0 %v306
    %1246 = vmatprep.subr.mxu0 %v303
    %1247 = vmatpush1.msra.mxu0 %v302
    %1248 = vmatprep.subr.mxu0 %v299
    %1249 = vmatpush1.msra.mxu0 %v298
    %1250 = vmatprep.subr.mxu0 %v295
    %1251 = vmatpush1.msra.mxu0 %v294
    %1252 = vmatprep.subr.mxu0 %v291
    %1253 = vmatpush1.msra.mxu0 %v290
    %1254 = vmatprep.subr.mxu0 %v287
    %1255 = vmatpush1.msra.mxu0 %v286
    %1256 = vmatprep.subr.mxu0 %v283
    %1257 = vmatpush1.msra.mxu0 %v282
    %1258 = vmatprep.subr.mxu0 %v279
    %1259 = vmatpush1.msra.mxu0 %v278
    %1260 = vmatprep.subr.mxu0 %v275
    %1261 = vmatpush1.msra.mxu0 %v274
    %1262 = vmatprep.subr.mxu0 %v271
    %1263 = vmatpush1.msra.mxu0 %v270
    %1264 = vmatprep.subr.mxu0 %v267
    %1265 = vmatpush1.msra.mxu0 %v266
    %1266 = vmatprep.subr.mxu0 %v263
    %1267 = vmatpush1.msra.mxu0 %v262
    %1268 = vmatprep.subr.mxu0 %v259
    %1269 = vmatpush1.msra.mxu0 %v258
    %1270 = vmatprep.subr.mxu0 %v255
    %1271 = vmatpush1.msra.mxu0 %v254
    %1272 = vmatprep.subr.mxu0 0.0
    %1273 = vmatpush2.msra.mxu0 0.0
    %1274 = vmatprep.subr.mxu0 0.0
    %1275 = vmatpush2.msra.mxu0 0.0
    %1276 = vmatprep.subr.mxu0 0.0
    %1277 = vmatpush2.msra.mxu0 0.0
    %1278 = vmatprep.subr.mxu0 0.0
    %1279 = vmatpush2.msra.mxu0 0.0
    %1280 = vmatprep.subr.mxu0 0.0
    %1281 = vmatpush2.msra.mxu0 0.0
    %1282 = vmatprep.subr.mxu0 0.0
    %1283 = vmatpush2.msra.mxu0 0.0
    %1284 = vmatprep.subr.mxu0 0.0
    %1285 = vmatpush2.msra.mxu0 0.0
    %1286 = vmatprep.subr.mxu0 0.0
    %1287 = vmatpush2.msra.mxu0 0.0
    %1288 = vmatprep.subr.mxu0 0.0
    %1289 = vmatpush2.msra.mxu0 0.0
    %1290 = vmatprep.subr.mxu0 0.0
    %1291 = vmatpush2.msra.mxu0 0.0
    %1292 = vmatprep.subr.mxu0 0.0
    %1293 = vmatpush2.msra.mxu0 0.0
    %1294 = vmatprep.subr.mxu0 0.0
    %1295 = vmatpush2.msra.mxu0 0.0
    %1296 = vmatprep.subr.mxu0 0.0
    %1297 = vmatpush2.msra.mxu0 0.0
    %1298 = vmatprep.subr.mxu0 0.0
    %1299 = vmatpush2.msra.mxu0 0.0
    %1300 = vmatprep.subr.mxu0 0.0
    %1301 = vmatpush2.msra.mxu0 0.0
    %1302 = vmatprep.subr.mxu0 0.0
    %1303 = vmatpush2.msra.mxu0 0.0
    %1304 = vmatprep.mubr.f32.mxu0 0.0
    %1305 = vmatmul.mubr.f32.gmra.mxu0 %v1238
    %v1306 = vpop.f32.mrf.mxu0
    %v1307 = vadd.f32 0.0, %v1306
    %v1308 = vpop.f32.mrf.mxu0
    %v1309 = vadd.f32 0.0, %v1308
    %1310 = vdwg.mxu0
    %1311 = vmatprep.subr.mxu0 %v317
    %1312 = vmatpush1.msra.mxu0 %v316
    %1313 = vmatprep.subr.mxu0 %v313
    %1314 = vmatpush1.msra.mxu0 %v312
    %1315 = vmatprep.subr.mxu0 %v309
    %1316 = vmatpush1.msra.mxu0 %v308
    %1317 = vmatprep.subr.mxu0 %v305
    %1318 = vmatpush1.msra.mxu0 %v304
    %1319 = vmatprep.subr.mxu0 %v301
    %1320 = vmatpush1.msra.mxu0 %v300
    %1321 = vmatprep.subr.mxu0 %v297
    %1322 = vmatpush1.msra.mxu0 %v296
    %1323 = vmatprep.subr.mxu0 %v293
    %1324 = vmatpush1.msra.mxu0 %v292
    %1325 = vmatprep.subr.mxu0 %v289
    %1326 = vmatpush1.msra.mxu0 %v288
    %1327 = vmatprep.subr.mxu0 %v285
    %1328 = vmatpush1.msra.mxu0 %v284
    %1329 = vmatprep.subr.mxu0 %v281
    %1330 = vmatpush1.msra.mxu0 %v280
    %1331 = vmatprep.subr.mxu0 %v277
    %1332 = vmatpush1.msra.mxu0 %v276
    %1333 = vmatprep.subr.mxu0 %v273
    %1334 = vmatpush1.msra.mxu0 %v272
    %1335 = vmatprep.subr.mxu0 %v269
    %1336 = vmatpush1.msra.mxu0 %v268
    %1337 = vmatprep.subr.mxu0 %v265
    %1338 = vmatpush1.msra.mxu0 %v264
    %1339 = vmatprep.subr.mxu0 %v261
    %1340 = vmatpush1.msra.mxu0 %v260
    %1341 = vmatprep.subr.mxu0 %v257
    %1342 = vmatpush1.msra.mxu0 %v256
    %1343 = vmatprep.subr.mxu0 0.0
    %1344 = vmatpush2.msra.mxu0 0.0
    %1345 = vmatprep.subr.mxu0 0.0
    %1346 = vmatpush2.msra.mxu0 0.0
    %1347 = vmatprep.subr.mxu0 0.0
    %1348 = vmatpush2.msra.mxu0 0.0
    %1349 = vmatprep.subr.mxu0 0.0
    %1350 = vmatpush2.msra.mxu0 0.0
    %1351 = vmatprep.subr.mxu0 0.0
    %1352 = vmatpush2.msra.mxu0 0.0
    %1353 = vmatprep.subr.mxu0 0.0
    %1354 = vmatpush2.msra.mxu0 0.0
    %1355 = vmatprep.subr.mxu0 0.0
    %1356 = vmatpush2.msra.mxu0 0.0
    %1357 = vmatprep.subr.mxu0 0.0
    %1358 = vmatpush2.msra.mxu0 0.0
    %1359 = vmatprep.subr.mxu0 0.0
    %1360 = vmatpush2.msra.mxu0 0.0
    %1361 = vmatprep.subr.mxu0 0.0
    %1362 = vmatpush2.msra.mxu0 0.0
    %1363 = vmatprep.subr.mxu0 0.0
    %1364 = vmatpush2.msra.mxu0 0.0
    %1365 = vmatprep.subr.mxu0 0.0
    %1366 = vmatpush2.msra.mxu0 0.0
    %1367 = vmatprep.subr.mxu0 0.0
    %1368 = vmatpush2.msra.mxu0 0.0
    %1369 = vmatprep.subr.mxu0 0.0
    %1370 = vmatpush2.msra.mxu0 0.0
    %1371 = vmatprep.subr.mxu0 0.0
    %1372 = vmatpush2.msra.mxu0 0.0
    %1373 = vmatprep.subr.mxu0 0.0
    %1374 = vmatpush2.msra.mxu0 0.0
    %1375 = vmatprep.mubr.f32.mxu0 0.0
    %1376 = vmatmul.mubr.f32.gmra.mxu0 %v1238
    %v1377 = vpop.f32.mrf.mxu0
    %v1378 = vadd.f32 0.0, %v1377
    %v1379 = vpop.f32.mrf.mxu0
    %v1380 = vadd.f32 0.0, %v1379
    %1381 = vdwg.mxu0
    %v1386 = vrot.slane %v1307, 3
    %v1387 = vrot.slane %v1309, 3
    %v1388 = vrot.slane %v1378, 3
    %v1389 = vrot.slane %v1380, 3
    %v1394 = vadd.f32 %v179, %v1386
    %v1395 = vadd.f32 %v181, %v1387
    %v1396 = vadd.f32 %v250, %v1388
    %v1397 = vadd.f32 %v252, %v1389
    %v1398 = vxor.u32 %v1394, 2147483648
    %v1399 = vmul.f32 %v1398, 1.442695
    %v1400 = vpow.pop %v1399
    %v1401 = vadd.f32 %v1400, 1.0
    %v1402 = vrcp.pop %v1401
    %v1403 = vmul.f32 1.0, %v1402
    %v1404 = vxor.u32 %v1395, 2147483648
    %v1405 = vmul.f32 %v1404, 1.442695
    %v1406 = vpow.pop %v1405
    %v1407 = vadd.f32 %v1406, 1.0
    %v1408 = vrcp.pop %v1407
    %v1409 = vmul.f32 1.0, %v1408
    %v1410 = vtanh.pop %v1396
    %v1411 = vxor.u32 %v1397, 2147483648
    %v1412 = vmul.f32 %v1411, 1.442695
    %v1413 = vpow.pop %v1412
    %v1414 = vadd.f32 %v1413, 1.0
    %v1415 = vrcp.pop %v1414
    %v1416 = vmul.f32 1.0, %v1415
    %v1418 = vrot.slane %v1234, 7
    %v1420 = vmul.f32 %v1409, %v1418
    %v1421 = vmul.f32 %v1403, %v1410
    %v1422 = vadd.f32 %v1420, %v1421
    %v1423 = vtanh.pop %v1422
    %v1424 = vmul.f32 %v1416, %v1423
    %v1426 = vrot.slane %v1424, 5
    %1428 = vmatprep.subr.mxu0 %v315
    %1429 = vmatpush1.msra.mxu0 %v314
    %1430 = vmatprep.subr.mxu0 %v311
    %1431 = vmatpush1.msra.mxu0 %v310
    %1432 = vmatprep.subr.mxu0 %v307
    %1433 = vmatpush1.msra.mxu0 %v306
    %1434 = vmatprep.subr.mxu0 %v303
    %1435 = vmatpush1.msra.mxu0 %v302
    %1436 = vmatprep.subr.mxu0 %v299
    %1437 = vmatpush1.msra.mxu0 %v298
    %1438 = vmatprep.subr.mxu0 %v295
    %1439 = vmatpush1.msra.mxu0 %v294
    %1440 = vmatprep.subr.mxu0 %v291
    %1441 = vmatpush1.msra.mxu0 %v290
    %1442 = vmatprep.subr.mxu0 %v287
    %1443 = vmatpush1.msra.mxu0 %v286
    %1444 = vmatprep.subr.mxu0 %v283
    %1445 = vmatpush1.msra.mxu0 %v282
    %1446 = vmatprep.subr.mxu0 %v279
    %1447 = vmatpush1.msra.mxu0 %v278
    %1448 = vmatprep.subr.mxu0 %v275
    %1449 = vmatpush1.msra.mxu0 %v274
    %1450 = vmatprep.subr.mxu0 %v271
    %1451 = vmatpush1.msra.mxu0 %v270
    %1452 = vmatprep.subr.mxu0 %v267
    %1453 = vmatpush1.msra.mxu0 %v266
    %1454 = vmatprep.subr.mxu0 %v263
    %1455 = vmatpush1.msra.mxu0 %v262
    %1456 = vmatprep.subr.mxu0 %v259
    %1457 = vmatpush1.msra.mxu0 %v258
    %1458 = vmatprep.subr.mxu0 %v255
    %1459 = vmatpush1.msra.mxu0 %v254
    %1460 = vmatprep.subr.mxu0 0.0
    %1461 = vmatpush2.msra.mxu0 0.0
    %1462 = vmatprep.subr.mxu0 0.0
    %1463 = vmatpush2.msra.mxu0 0.0
    %1464 = vmatprep.subr.mxu0 0.0
    %1465 = vmatpush2.msra.mxu0 0.0
    %1466 = vmatprep.subr.mxu0 0.0
    %1467 = vmatpush2.msra.mxu0 0.0
    %1468 = vmatprep.subr.mxu0 0.0
    %1469 = vmatpush2.msra.mxu0 0.0
    %1470 = vmatprep.subr.mxu0 0.0
    %1471 = vmatpush2.msra.mxu0 0.0
    %1472 = vmatprep.subr.mxu0 0.0
    %1473 = vmatpush2.msra.mxu0 0.0
    %1474 = vmatprep.subr.mxu0 0.0
    %1475 = vmatpush2.msra.mxu0 0.0
    %1476 = vmatprep.subr.mxu0 0.0
    %1477 = vmatpush2.msra.mxu0 0.0
    %1478 = vmatprep.subr.mxu0 0.0
    %1479 = vmatpush2.msra.mxu0 0.0
    %1480 = vmatprep.subr.mxu0 0.0
    %1481 = vmatpush2.msra.mxu0 0.0
    %1482 = vmatprep.subr.mxu0 0.0
    %1483 = vmatpush2.msra.mxu0 0.0
    %1484 = vmatprep.subr.mxu0 0.0
    %1485 = vmatpush2.msra.mxu0 0.0
    %1486 = vmatprep.subr.mxu0 0.0
    %1487 = vmatpush2.msra.mxu0 0.0
    %1488 = vmatprep.subr.mxu0 0.0
    %1489 = vmatpush2.msra.mxu0 0.0
    %1490 = vmatprep.subr.mxu0 0.0
    %1491 = vmatpush2.msra.mxu0 0.0
    %1492 = vmatprep.mubr.f32.mxu0 0.0
    %1493 = vmatmul.mubr.f32.gmra.mxu0 %v1426
    %v1494 = vpop.f32.mrf.mxu0
    %v1495 = vadd.f32 0.0, %v1494
    %v1496 = vpop.f32.mrf.mxu0
    %v1497 = vadd.f32 0.0, %v1496
    %1498 = vdwg.mxu0
    %1499 = vmatprep.subr.mxu0 %v317
    %1500 = vmatpush1.msra.mxu0 %v316
    %1501 = vmatprep.subr.mxu0 %v313
    %1502 = vmatpush1.msra.mxu0 %v312
    %1503 = vmatprep.subr.mxu0 %v309
    %1504 = vmatpush1.msra.mxu0 %v308
    %1505 = vmatprep.subr.mxu0 %v305
    %1506 = vmatpush1.msra.mxu0 %v304
    %1507 = vmatprep.subr.mxu0 %v301
    %1508 = vmatpush1.msra.mxu0 %v300
    %1509 = vmatprep.subr.mxu0 %v297
    %1510 = vmatpush1.msra.mxu0 %v296
    %1511 = vmatprep.subr.mxu0 %v293
    %1512 = vmatpush1.msra.mxu0 %v292
    %1513 = vmatprep.subr.mxu0 %v289
    %1514 = vmatpush1.msra.mxu0 %v288
    %1515 = vmatprep.subr.mxu0 %v285
    %1516 = vmatpush1.msra.mxu0 %v284
    %1517 = vmatprep.subr.mxu0 %v281
    %1518 = vmatpush1.msra.mxu0 %v280
    %1519 = vmatprep.subr.mxu0 %v277
    %1520 = vmatpush1.msra.mxu0 %v276
    %1521 = vmatprep.subr.mxu0 %v273
    %1522 = vmatpush1.msra.mxu0 %v272
    %1523 = vmatprep.subr.mxu0 %v269
    %1524 = vmatpush1.msra.mxu0 %v268
    %1525 = vmatprep.subr.mxu0 %v265
    %1526 = vmatpush1.msra.mxu0 %v264
    %1527 = vmatprep.subr.mxu0 %v261
    %1528 = vmatpush1.msra.mxu0 %v260
    %1529 = vmatprep.subr.mxu0 %v257
    %1530 = vmatpush1.msra.mxu0 %v256
    %1531 = vmatprep.subr.mxu0 0.0
    %1532 = vmatpush2.msra.mxu0 0.0
    %1533 = vmatprep.subr.mxu0 0.0
    %1534 = vmatpush2.msra.mxu0 0.0
    %1535 = vmatprep.subr.mxu0 0.0
    %1536 = vmatpush2.msra.mxu0 0.0
    %1537 = vmatprep.subr.mxu0 0.0
    %1538 = vmatpush2.msra.mxu0 0.0
    %1539 = vmatprep.subr.mxu0 0.0
    %1540 = vmatpush2.msra.mxu0 0.0
    %1541 = vmatprep.subr.mxu0 0.0
    %1542 = vmatpush2.msra.mxu0 0.0
    %1543 = vmatprep.subr.mxu0 0.0
    %1544 = vmatpush2.msra.mxu0 0.0
    %1545 = vmatprep.subr.mxu0 0.0
    %1546 = vmatpush2.msra.mxu0 0.0
    %1547 = vmatprep.subr.mxu0 0.0
    %1548 = vmatpush2.msra.mxu0 0.0
    %1549 = vmatprep.subr.mxu0 0.0
    %1550 = vmatpush2.msra.mxu0 0.0
    %1551 = vmatprep.subr.mxu0 0.0
    %1552 = vmatpush2.msra.mxu0 0.0
    %1553 = vmatprep.subr.mxu0 0.0
    %1554 = vmatpush2.msra.mxu0 0.0
    %1555 = vmatprep.subr.mxu0 0.0
    %1556 = vmatpush2.msra.mxu0 0.0
    %1557 = vmatprep.subr.mxu0 0.0
    %1558 = vmatpush2.msra.mxu0 0.0
    %1559 = vmatprep.subr.mxu0 0.0
    %1560 = vmatpush2.msra.mxu0 0.0
    %1561 = vmatprep.subr.mxu0 0.0
    %1562 = vmatpush2.msra.mxu0 0.0
    %1563 = vmatprep.mubr.f32.mxu0 0.0
    %1564 = vmatmul.mubr.f32.gmra.mxu0 %v1426
    %v1565 = vpop.f32.mrf.mxu0
    %v1566 = vadd.f32 0.0, %v1565
    %v1567 = vpop.f32.mrf.mxu0
    %v1568 = vadd.f32 0.0, %v1567
    %1569 = vdwg.mxu0
    %v1574 = vrot.slane %v1495, 2
    %v1575 = vrot.slane %v1497, 2
    %v1576 = vrot.slane %v1566, 2
    %v1577 = vrot.slane %v1568, 2
    %v1582 = vadd.f32 %v179, %v1574
    %v1583 = vadd.f32 %v181, %v1575
    %v1584 = vadd.f32 %v250, %v1576
    %v1585 = vadd.f32 %v252, %v1577
    %v1586 = vxor.u32 %v1582, 2147483648
    %v1587 = vmul.f32 %v1586, 1.442695
    %v1588 = vpow.pop %v1587
    %v1589 = vadd.f32 %v1588, 1.0
    %v1590 = vrcp.pop %v1589
    %v1591 = vmul.f32 1.0, %v1590
    %v1592 = vxor.u32 %v1583, 2147483648
    %v1593 = vmul.f32 %v1592, 1.442695
    %v1594 = vpow.pop %v1593
    %v1595 = vadd.f32 %v1594, 1.0
    %v1596 = vrcp.pop %v1595
    %v1597 = vmul.f32 1.0, %v1596
    %v1598 = vtanh.pop %v1584
    %v1599 = vxor.u32 %v1585, 2147483648
    %v1600 = vmul.f32 %v1599, 1.442695
    %v1601 = vpow.pop %v1600
    %v1602 = vadd.f32 %v1601, 1.0
    %v1603 = vrcp.pop %v1602
    %v1604 = vmul.f32 1.0, %v1603
    %v1606 = vrot.slane %v1422, 7
    %v1608 = vmul.f32 %v1597, %v1606
    %v1609 = vmul.f32 %v1591, %v1598
    %v1610 = vadd.f32 %v1608, %v1609
    %v1611 = vtanh.pop %v1610
    %v1612 = vmul.f32 %v1604, %v1611
    %v1614 = vrot.slane %v1612, 6
    %1616 = vmatprep.subr.mxu0 %v315
    %1617 = vmatpush1.msra.mxu0 %v314
    %1618 = vmatprep.subr.mxu0 %v311
    %1619 = vmatpush1.msra.mxu0 %v310
    %1620 = vmatprep.subr.mxu0 %v307
    %1621 = vmatpush1.msra.mxu0 %v306
    %1622 = vmatprep.subr.mxu0 %v303
    %1623 = vmatpush1.msra.mxu0 %v302
    %1624 = vmatprep.subr.mxu0 %v299
    %1625 = vmatpush1.msra.mxu0 %v298
    %1626 = vmatprep.subr.mxu0 %v295
    %1627 = vmatpush1.msra.mxu0 %v294
    %1628 = vmatprep.subr.mxu0 %v291
    %1629 = vmatpush1.msra.mxu0 %v290
    %1630 = vmatprep.subr.mxu0 %v287
    %1631 = vmatpush1.msra.mxu0 %v286
    %1632 = vmatprep.subr.mxu0 %v283
    %1633 = vmatpush1.msra.mxu0 %v282
    %1634 = vmatprep.subr.mxu0 %v279
    %1635 = vmatpush1.msra.mxu0 %v278
    %1636 = vmatprep.subr.mxu0 %v275
    %1637 = vmatpush1.msra.mxu0 %v274
    %1638 = vmatprep.subr.mxu0 %v271
    %1639 = vmatpush1.msra.mxu0 %v270
    %1640 = vmatprep.subr.mxu0 %v267
    %1641 = vmatpush1.msra.mxu0 %v266
    %1642 = vmatprep.subr.mxu0 %v263
    %1643 = vmatpush1.msra.mxu0 %v262
    %1644 = vmatprep.subr.mxu0 %v259
    %1645 = vmatpush1.msra.mxu0 %v258
    %1646 = vmatprep.subr.mxu0 %v255
    %1647 = vmatpush1.msra.mxu0 %v254
    %1648 = vmatprep.subr.mxu0 0.0
    %1649 = vmatpush2.msra.mxu0 0.0
    %1650 = vmatprep.subr.mxu0 0.0
    %1651 = vmatpush2.msra.mxu0 0.0
    %1652 = vmatprep.subr.mxu0 0.0
    %1653 = vmatpush2.msra.mxu0 0.0
    %1654 = vmatprep.subr.mxu0 0.0
    %1655 = vmatpush2.msra.mxu0 0.0
    %1656 = vmatprep.subr.mxu0 0.0
    %1657 = vmatpush2.msra.mxu0 0.0
    %1658 = vmatprep.subr.mxu0 0.0
    %1659 = vmatpush2.msra.mxu0 0.0
    %1660 = vmatprep.subr.mxu0 0.0
    %1661 = vmatpush2.msra.mxu0 0.0
    %1662 = vmatprep.subr.mxu0 0.0
    %1663 = vmatpush2.msra.mxu0 0.0
    %1664 = vmatprep.subr.mxu0 0.0
    %1665 = vmatpush2.msra.mxu0 0.0
    %1666 = vmatprep.subr.mxu0 0.0
    %1667 = vmatpush2.msra.mxu0 0.0
    %1668 = vmatprep.subr.mxu0 0.0
    %1669 = vmatpush2.msra.mxu0 0.0
    %1670 = vmatprep.subr.mxu0 0.0
    %1671 = vmatpush2.msra.mxu0 0.0
    %1672 = vmatprep.subr.mxu0 0.0
    %1673 = vmatpush2.msra.mxu0 0.0
    %1674 = vmatprep.subr.mxu0 0.0
    %1675 = vmatpush2.msra.mxu0 0.0
    %1676 = vmatprep.subr.mxu0 0.0
    %1677 = vmatpush2.msra.mxu0 0.0
    %1678 = vmatprep.subr.mxu0 0.0
    %1679 = vmatpush2.msra.mxu0 0.0
    %1680 = vmatprep.mubr.f32.mxu0 0.0
    %1681 = vmatmul.mubr.f32.gmra.mxu0 %v1614
    %v1682 = vpop.f32.mrf.mxu0
    %v1683 = vadd.f32 0.0, %v1682
    %v1684 = vpop.f32.mrf.mxu0
    %v1685 = vadd.f32 0.0, %v1684
    %1686 = vdwg.mxu0
    %1687 = vmatprep.subr.mxu0 %v317
    %1688 = vmatpush1.msra.mxu0 %v316
    %1689 = vmatprep.subr.mxu0 %v313
    %1690 = vmatpush1.msra.mxu0 %v312
    %1691 = vmatprep.subr.mxu0 %v309
    %1692 = vmatpush1.msra.mxu0 %v308
    %1693 = vmatprep.subr.mxu0 %v305
    %1694 = vmatpush1.msra.mxu0 %v304
    %1695 = vmatprep.subr.mxu0 %v301
    %1696 = vmatpush1.msra.mxu0 %v300
    %1697 = vmatprep.subr.mxu0 %v297
    %1698 = vmatpush1.msra.mxu0 %v296
    %1699 = vmatprep.subr.mxu0 %v293
    %1700 = vmatpush1.msra.mxu0 %v292
    %1701 = vmatprep.subr.mxu0 %v289
    %1702 = vmatpush1.msra.mxu0 %v288
    %1703 = vmatprep.subr.mxu0 %v285
    %1704 = vmatpush1.msra.mxu0 %v284
    %1705 = vmatprep.subr.mxu0 %v281
    %1706 = vmatpush1.msra.mxu0 %v280
    %1707 = vmatprep.subr.mxu0 %v277
    %1708 = vmatpush1.msra.mxu0 %v276
    %1709 = vmatprep.subr.mxu0 %v273
    %1710 = vmatpush1.msra.mxu0 %v272
    %1711 = vmatprep.subr.mxu0 %v269
    %1712 = vmatpush1.msra.mxu0 %v268
    %1713 = vmatprep.subr.mxu0 %v265
    %1714 = vmatpush1.msra.mxu0 %v264
    %1715 = vmatprep.subr.mxu0 %v261
    %1716 = vmatpush1.msra.mxu0 %v260
    %1717 = vmatprep.subr.mxu0 %v257
    %1718 = vmatpush1.msra.mxu0 %v256
    %1719 = vmatprep.subr.mxu0 0.0
    %1720 = vmatpush2.msra.mxu0 0.0
    %1721 = vmatprep.subr.mxu0 0.0
    %1722 = vmatpush2.msra.mxu0 0.0
    %1723 = vmatprep.subr.mxu0 0.0
    %1724 = vmatpush2.msra.mxu0 0.0
    %1725 = vmatprep.subr.mxu0 0.0
    %1726 = vmatpush2.msra.mxu0 0.0
    %1727 = vmatprep.subr.mxu0 0.0
    %1728 = vmatpush2.msra.mxu0 0.0
    %1729 = vmatprep.subr.mxu0 0.0
    %1730 = vmatpush2.msra.mxu0 0.0
    %1731 = vmatprep.subr.mxu0 0.0
    %1732 = vmatpush2.msra.mxu0 0.0
    %1733 = vmatprep.subr.mxu0 0.0
    %1734 = vmatpush2.msra.mxu0 0.0
    %1735 = vmatprep.subr.mxu0 0.0
    %1736 = vmatpush2.msra.mxu0 0.0
    %1737 = vmatprep.subr.mxu0 0.0
    %1738 = vmatpush2.msra.mxu0 0.0
    %1739 = vmatprep.subr.mxu0 0.0
    %1740 = vmatpush2.msra.mxu0 0.0
    %1741 = vmatprep.subr.mxu0 0.0
    %1742 = vmatpush2.msra.mxu0 0.0
    %1743 = vmatprep.subr.mxu0 0.0
    %1744 = vmatpush2.msra.mxu0 0.0
    %1745 = vmatprep.subr.mxu0 0.0
    %1746 = vmatpush2.msra.mxu0 0.0
    %1747 = vmatprep.subr.mxu0 0.0
    %1748 = vmatpush2.msra.mxu0 0.0
    %1749 = vmatprep.subr.mxu0 0.0
    %1750 = vmatpush2.msra.mxu0 0.0
    %1751 = vmatprep.mubr.f32.mxu0 0.0
    %1752 = vmatmul.mubr.f32.gmra.mxu0 %v1614
    %v1753 = vpop.f32.mrf.mxu0
    %v1754 = vadd.f32 0.0, %v1753
    %v1755 = vpop.f32.mrf.mxu0
    %v1756 = vadd.f32 0.0, %v1755
    %1757 = vdwg.mxu0
    %v1762 = vrot.slane %v1683, 1
    %v1763 = vrot.slane %v1685, 1
    %v1764 = vrot.slane %v1754, 1
    %v1765 = vrot.slane %v1756, 1
    %v1770 = vadd.f32 %v179, %v1762
    %v1771 = vadd.f32 %v181, %v1763
    %v1772 = vadd.f32 %v250, %v1764
    %v1773 = vadd.f32 %v252, %v1765
    %v1774 = vxor.u32 %v1770, 2147483648
    %v1775 = vmul.f32 %v1774, 1.442695
    %v1776 = vpow.pop %v1775
    %v1777 = vadd.f32 %v1776, 1.0
    %v1778 = vrcp.pop %v1777
    %v1779 = vmul.f32 1.0, %v1778
    %v1780 = vxor.u32 %v1771, 2147483648
    %v1781 = vmul.f32 %v1780, 1.442695
    %v1782 = vpow.pop %v1781
    %v1783 = vadd.f32 %v1782, 1.0
    %v1784 = vrcp.pop %v1783
    %v1785 = vmul.f32 1.0, %v1784
    %v1786 = vtanh.pop %v1772
    %v1787 = vxor.u32 %v1773, 2147483648
    %v1788 = vmul.f32 %v1787, 1.442695
    %v1789 = vpow.pop %v1788
    %v1790 = vadd.f32 %v1789, 1.0
    %v1791 = vrcp.pop %v1790
    %v1792 = vmul.f32 1.0, %v1791
    %v1794 = vrot.slane %v1610, 7
    %v1796 = vmul.f32 %v1785, %v1794
    %v1797 = vmul.f32 %v1779, %v1786
    %v1798 = vadd.f32 %v1796, %v1797
    %v1799 = vtanh.pop %v1798
    %v1800 = vmul.f32 %v1792, %v1799
    %vm1801 = vcmask 1040384
    %v1802 = vsel %vm1801, %v487, %v672
    %vm1803 = vcmask 1041408
    %v1804 = vsel %vm1803, %v1802, %v860
    %vm1805 = vcmask 1042432
    %v1806 = vsel %vm1805, %v1804, %v1048
    %vm1807 = vcmask 1043456
    %v1808 = vsel %vm1807, %v1806, %v1236
    %vm1809 = vcmask 1044480
    %v1810 = vsel %vm1809, %v1808, %v1424
    %vm1811 = vcmask 1045504
    %v1812 = vsel %vm1811, %v1810, %v1612
    %vm1813 = vcmask 1046528
    %v1814 = vsel %vm1813, %v1812, %v1800
    %v1815 = vld [vmem:[#allocation8] sm:$0xff]
    %v1816 = vld [vmem:[#allocation8 + $0x8] sm:$0xff]
    %v1817 = vld [vmem:[#allocation8 + $0x10] sm:$0xff]
    %v1818 = vld [vmem:[#allocation8 + $0x18] sm:$0xff]
    %v1819 = vld [vmem:[#allocation8 + $0x20] sm:$0xff]
    %v1820 = vld [vmem:[#allocation8 + $0x28] sm:$0xff]
    %v1821 = vld [vmem:[#allocation8 + $0x30] sm:$0xff]
    %v1822 = vld [vmem:[#allocation8 + $0x38] sm:$0xff]
    %v1823 = vld [vmem:[#allocation8 + $0x40] sm:$0xff]
    %v1824 = vld [vmem:[#allocation8 + $0x48] sm:$0xff]
    %v1825 = vld [vmem:[#allocation8 + $0x50] sm:$0xff]
    %v1826 = vld [vmem:[#allocation8 + $0x58] sm:$0xff]
    %v1827 = vld [vmem:[#allocation8 + $0x60] sm:$0xff]
    %v1828 = vld [vmem:[#allocation8 + $0x68] sm:$0xff]
    %v1829 = vld [vmem:[#allocation8 + $0x70] sm:$0xff]
    %v1830 = vld [vmem:[#allocation8 + $0x78] sm:$0xff]
    %v1831 = vld [vmem:[%s5] sm:$0x1]
    %v1833 = vlaneseq
    %v1834 = vshrl.u32 %v1833, 7
    %v1835 = vsub.s32 0, %v1834
    %v1836 = vrot.slane %v1831, %v1835
    %1838 = vmatprep.subr.mxu0 0.0
    %1839 = vmatpush1.msra.mxu0 %v1830
    %1840 = vmatprep.subr.mxu0 0.0
    %1841 = vmatpush1.msra.mxu0 %v1829
    %1842 = vmatprep.subr.mxu0 0.0
    %1843 = vmatpush1.msra.mxu0 %v1828
    %1844 = vmatprep.subr.mxu0 0.0
    %1845 = vmatpush1.msra.mxu0 %v1827
    %1846 = vmatprep.subr.mxu0 0.0
    %1847 = vmatpush1.msra.mxu0 %v1826
    %1848 = vmatprep.subr.mxu0 0.0
    %1849 = vmatpush1.msra.mxu0 %v1825
    %1850 = vmatprep.subr.mxu0 0.0
    %1851 = vmatpush1.msra.mxu0 %v1824
    %1852 = vmatprep.subr.mxu0 0.0
    %1853 = vmatpush1.msra.mxu0 %v1823
    %1854 = vmatprep.subr.mxu0 0.0
    %1855 = vmatpush1.msra.mxu0 %v1822
    %1856 = vmatprep.subr.mxu0 0.0
    %1857 = vmatpush1.msra.mxu0 %v1821
    %1858 = vmatprep.subr.mxu0 0.0
    %1859 = vmatpush1.msra.mxu0 %v1820
    %1860 = vmatprep.subr.mxu0 0.0
    %1861 = vmatpush1.msra.mxu0 %v1819
    %1862 = vmatprep.subr.mxu0 0.0
    %1863 = vmatpush1.msra.mxu0 %v1818
    %1864 = vmatprep.subr.mxu0 0.0
    %1865 = vmatpush1.msra.mxu0 %v1817
    %1866 = vmatprep.subr.mxu0 0.0
    %1867 = vmatpush1.msra.mxu0 %v1816
    %1868 = vmatprep.subr.mxu0 0.0
    %1869 = vmatpush1.msra.mxu0 %v1815
    %1870 = vmatprep.subr.mxu0 0.0
    %1871 = vmatpush2.msra.mxu0 0.0
    %1872 = vmatprep.subr.mxu0 0.0
    %1873 = vmatpush2.msra.mxu0 0.0
    %1874 = vmatprep.subr.mxu0 0.0
    %1875 = vmatpush2.msra.mxu0 0.0
    %1876 = vmatprep.subr.mxu0 0.0
    %1877 = vmatpush2.msra.mxu0 0.0
    %1878 = vmatprep.subr.mxu0 0.0
    %1879 = vmatpush2.msra.mxu0 0.0
    %1880 = vmatprep.subr.mxu0 0.0
    %1881 = vmatpush2.msra.mxu0 0.0
    %1882 = vmatprep.subr.mxu0 0.0
    %1883 = vmatpush2.msra.mxu0 0.0
    %1884 = vmatprep.subr.mxu0 0.0
    %1885 = vmatpush2.msra.mxu0 0.0
    %1886 = vmatprep.subr.mxu0 0.0
    %1887 = vmatpush2.msra.mxu0 0.0
    %1888 = vmatprep.subr.mxu0 0.0
    %1889 = vmatpush2.msra.mxu0 0.0
    %1890 = vmatprep.subr.mxu0 0.0
    %1891 = vmatpush2.msra.mxu0 0.0
    %1892 = vmatprep.subr.mxu0 0.0
    %1893 = vmatpush2.msra.mxu0 0.0
    %1894 = vmatprep.subr.mxu0 0.0
    %1895 = vmatpush2.msra.mxu0 0.0
    %1896 = vmatprep.subr.mxu0 0.0
    %1897 = vmatpush2.msra.mxu0 0.0
    %1898 = vmatprep.subr.mxu0 0.0
    %1899 = vmatpush2.msra.mxu0 0.0
    %1900 = vmatprep.subr.mxu0 0.0
    %1901 = vmatpush2.msra.mxu0 0.0
    %1902 = vmatprep.mubr.f32.mxu0 0.0
    %1903 = vmatmul.mubr.f32.gmra.mxu0 %v1814
    %v1904 = vpop.f32.mrf.mxu0
    %v1905 = vadd.f32 %v1836, %v1904
    %v1906 = vpop.f32.mrf.mxu0
    %1907 = vdwg.mxu0
    %1908 = vst [vmem:[#allocation10] sm:$0xff] %v1905
    // Predicated region
    $region42: #{tpu_custom_call.1} parent=1 // pred_check
      _
    $region43: #{tpu_custom_call.1} parent=1 // pred_check_branch
      %1910 = sbr.rel (0) target = $region45
    $region44: #{tpu_custom_call.1} parent=1 // pred_region
      %s1912 = ssub.s32 128, 128
      %1913 = vsyncadd [#allocation4], %s1912
      %s1915 = sshll.u32 [#allocation10], 4
      %s1916 = int_to_ptr.vmem [resolvable:$true] %s1915
      %1918 = dma.vmem_to_hbm [thread:$0]  %s1916, 128, %s6, [#allocation4]
    $region45: #{tpu_custom_call.1} parent=1 // pred_fallthru
      _
    // Predicated region
    $region46: #{tpu_custom_call.1} parent=1 // pred_check
      _
    $region47: #{tpu_custom_call.1} parent=1 // pred_check_branch
      %1920 = sbr.rel (0) target = $region49
    $region48: #{tpu_custom_call.1} parent=1 // pred_region
      %1921 = dma.done [#allocation4], 128
    $region49: #{tpu_custom_call.1} parent=1 // pred_fallthru
      _
    %1922 = vsyncpa [#allocation3], 1
    %1923 = vsyncpa [#allocation6], 1
    %1924 = vsyncpa [#allocation9], 1
    %1925 = vsyncpa [#allocation4], 1

</llo_original>
